<compile_context>
chip_gen: v7x
topology: tpu7x:2x2x1
jax: 0.10.0
libtpu: 0.0.40
codegen_flags: <defaults>
</compile_context>

<pallas_src>
import jax
import jax.numpy as jnp
from jax.experimental import pallas as pl
from jax.experimental.pallas import tpu as pltpu

# Static problem sizes
CIN, COUT, KH, KW = 1, 20, 5, 5
H, W = 32, 36
OH, OW = H - KH + 1, W - KW + 1      # 28, 32
OH_PAD = 32                          # conv-output rows padded to a sublane-tile multiple
PH, PW = OH // 2, OW // 2            # 14, 16
FEAT = COUT * PH * PW                # 4480
FC1_OUT = 120
FC3_OUT = 10
CW = COUT * OW                       # 640  lane-dense conv-output layout [oh, c*OW+ow]
KHW = KH * W                         # 180  im2col contraction length
HW = H * W                           # 1152 folded conv+pool+fc1 contraction length


# ----------------------------- Pallas kernel ------------------------------- #

def fused_kernel(xim_ref, xflat_ref, band_ref, cbias_ref, wd_ref, b1_ref, w3_ref, b3_ref,
                 x2_ref, x9_ref, x10_ref):
    """One batch block of B images.

    xim_ref  : (B*32, 180) bf16   im2col rows (rows 28..31 of each image are zero pad)
    xflat_ref: (B, 1152)   bf16   raw images, flattened
    band_ref : (180, 640)  bf16   banded conv weights  [dy*W+w, c*OW+ow]
    cbias_ref: (1, 640)    f32    conv bias expanded along the lane layout
    wd_ref   : (1152, 120) bf16   conv->avgpool->fc1 folded weights
    b1_ref   : (1, 120)    f32    folded fc1 bias (includes conv-bias contribution)
    w3_ref   : (120, 10)   f32
    b3_ref   : (1, 10)     f32
    x2_ref   : (B*32, 640) f32    conv output, lane-dense padded layout
    x9_ref   : (B, 120)    f32
    x10_ref  : (B, 10)     f32
    """
    # conv1: single MXU matmul, M = B*32, K = 180, N = 640.
    acc = jnp.dot(xim_ref[...], band_ref[...], preferred_element_type=jnp.float32)
    x2_ref[...] = acc + cbias_ref[...]

    # avgpool2x2 + fc1 folded into one (1152 -> 120) matmul (weights prefolded in the
    # wrapper).  dropout1/2/3 are identity in eval mode, so x9 == x7.
    h = jnp.dot(xflat_ref[...], wd_ref[...], preferred_element_type=jnp.float32) + b1_ref[...]
    x9_ref[...] = h

    # fc3 (tiny, f32).
    x10_ref[...] = jnp.dot(h, w3_ref[...], preferred_element_type=jnp.float32) + b3_ref[...]


# ------------------------------ JAX wrapper -------------------------------- #

def _pick_batch_block(n):
    """Largest divisor of n that is <= 32, a multiple of 8 when possible (tile-aligned
    block sublane dims), and leaving >= 2 grid steps for larger n (v7x megacore)."""
    cap = min(32, n)
    if n >= 16:
        cap = min(cap, n // 2)
    for b in range(cap, 0, -1):
        if n % b == 0 and (b % 8 == 0 or b == n):
            return b
    return n


@jax.jit
def model_forward(x1, w_conv, b_conv, w1, b1, w3, b3):
    N = x1.shape[0]
    B = _pick_batch_block(N)
    f32 = jnp.float32

    # ---- conv weights as a banded im2col matrix: band[dy*W + w, c*OW + ow] ----
    wk = w_conv[:, 0, :, :]                                              # (COUT, KH, KW)
    dxm = jnp.arange(W)[:, None] - jnp.arange(OW)[None, :]               # (W, OW)
    sel = (dxm[None, :, :] == jnp.arange(KW)[:, None, None]).astype(f32) # (KW, W, OW)
    band = jnp.einsum('cdk,kwo->dwco', wk, sel).reshape(KHW, CW)         # (180, 640)
    cbias = jnp.repeat(b_conv, OW)[None, :]                              # (1, 640)

    # ---- fold conv -> avgpool -> fc1 into a single (H*W -> 120) linear map ----
    # x7 = b1_eff + flatten(x) @ Wd   (pooling selectors & the 14-matmul loop removed)
    A_up = jnp.repeat(jnp.repeat(0.25 * w1.reshape(COUT, PH, PW, FC1_OUT), 2, axis=1),
                      2, axis=2)                                         # (COUT, 28, 32, 120)
    Wd = jnp.zeros((H, W, FC1_OUT), f32)
    for dy in range(KH):
        for dx in range(KW):
            contrib = jnp.einsum('c,cijf->ijf', w_conv[:, 0, dy, dx], A_up)  # (28, 32, 120)
            Wd = Wd.at[dy:dy + OH, dx:dx + OW, :].add(contrib)
    Wd = Wd.reshape(HW, FC1_OUT)
    b1_eff = (b1 + jnp.einsum('c,cijf->f', b_conv, A_up))[None, :]       # (1, 120)

    # ---- wrapper-side layout plumbing of activations (bf16 matmul operands) ----
    xim = jnp.concatenate([x1[:, 0, dy:dy + OH, :] for dy in range(KH)], axis=-1)  # (N,28,180)
    xim = jnp.pad(xim, ((0, 0), (0, OH_PAD - OH), (0, 0)))                         # (N,32,180)
    xim = xim.reshape(N * OH_PAD, KHW).astype(jnp.bfloat16)                        # (N*32,180)
    xflat = x1.reshape(N, HW).astype(jnp.bfloat16)                                 # (N,1152)
    band = band.astype(jnp.bfloat16)
    Wd = Wd.astype(jnp.bfloat16)
    b3r = b3.reshape(1, FC3_OUT)

    x2k, x9, x10 = pl.pallas_call(
        fused_kernel,
        out_shape=(
            jax.ShapeDtypeStruct((N * OH_PAD, CW), f32),
            jax.ShapeDtypeStruct((N, FC1_OUT), f32),
            jax.ShapeDtypeStruct((N, FC3_OUT), f32),
        ),
        grid=(N // B,),
        in_specs=[
            pl.BlockSpec((B * OH_PAD, KHW), lambda n: (n, 0)),
            pl.BlockSpec((B, HW), lambda n: (n, 0)),
            pl.BlockSpec((KHW, CW), lambda n: (0, 0)),
            pl.BlockSpec((1, CW), lambda n: (0, 0)),
            pl.BlockSpec((HW, FC1_OUT), lambda n: (0, 0)),
            pl.BlockSpec((1, FC1_OUT), lambda n: (0, 0)),
            pl.BlockSpec((FC1_OUT, FC3_OUT), lambda n: (0, 0)),
            pl.BlockSpec((1, FC3_OUT), lambda n: (0, 0)),
        ],
        out_specs=(
            pl.BlockSpec((B * OH_PAD, CW), lambda n: (n, 0)),
            pl.BlockSpec((B, FC1_OUT), lambda n: (n, 0)),
            pl.BlockSpec((B, FC3_OUT), lambda n: (n, 0)),
        ),
        compiler_params=pltpu.CompilerParams(
            dimension_semantics=("parallel",),
            vmem_limit_bytes=32 * 1024 * 1024,
        ),
    )(xim, xflat, band, cbias, Wd, b1_eff, w3, b3r)

    # Wrapper-side layout plumbing back to the module's NCHW shape.
    x2 = (x2k.reshape(N, OH_PAD, CW)[:, :OH, :]
          .reshape(N, OH, COUT, OW).transpose(0, 2, 1, 3))               # (N, 20, 28, 32)
    return x2, x9, x10


def reference_forward(x1, w_conv, b_conv, w1, b1, w3, b3):
    hp = jax.lax.Precision.HIGHEST
    x2 = jax.lax.conv_general_dilated(
        x1, w_conv, window_strides=(1, 1), padding='VALID',
        dimension_numbers=('NCHW', 'OIHW', 'NCHW'), precision=hp)
    x2 = x2 + b_conv[None, :, None, None]
    x4 = jax.lax.reduce_window(x2, 0.0, jax.lax.add,
                               (1, 1, 2, 2), (1, 1, 2, 2), 'VALID') * 0.25
    x6 = x4.reshape(x4.shape[0], -1)
    x7 = jnp.dot(x6, w1, precision=hp) + b1
    x9 = x7
    x10 = jnp.dot(x9, w3, precision=hp) + b3
    return x2, x9, x10


if __name__ == "__main__":
    key = jax.random.PRNGKey(0)
    ks = jax.random.split(key, 7)

    N = 16                                               # -> B=8, grid=(2,)
    x1 = jax.random.normal(ks[0], (N, CIN, H, W), jnp.float32)

    # Deterministic synthetic parameters (module __init__ defines the shapes).
    w_conv = jax.random.normal(ks[1], (COUT, CIN, KH, KW), jnp.float32) * 0.2
    b_conv = jax.random.normal(ks[2], (COUT,), jnp.float32) * 0.1
    w1 = jax.random.normal(ks[3], (FEAT, FC1_OUT), jnp.float32) * (1.0 / (FEAT ** 0.5))
    b1 = jax.random.normal(ks[4], (FC1_OUT,), jnp.float32) * 0.1
    w3 = jax.random.normal(ks[5], (FC1_OUT, FC3_OUT), jnp.float32) * (1.0 / (FC1_OUT ** 0.5))
    b3 = jax.random.normal(ks[6], (FC3_OUT,), jnp.float32) * 0.1

    x2, x9, x10 = model_forward(x1, w_conv, b_conv, w1, b1, w3, b3)
    jax.block_until_ready((x2, x9, x10))

    assert x2.shape == (N, COUT, OH, OW)
    assert x9.shape == (N, FC1_OUT)
    assert x10.shape == (N, FC3_OUT)

    # Sanity check against a pure-JAX reference (tolerance covers bf16 MXU operands).
    r2, r9, r10 = reference_forward(x1, w_conv, b_conv, w1, b1, w3, b3)
    assert jnp.allclose(x2, r2, rtol=5e-2, atol=5e-2), "conv/x2 mismatch"
    assert jnp.allclose(x9, r9, rtol=5e-2, atol=5e-2), "fc1/x9 mismatch"
    assert jnp.allclose(x10, r10, rtol=5e-2, atol=5e-2), "fc3/x10 mismatch"

    print("KERNEL_OK")
</pallas_src>

<mosaic_0001>
module attributes {stable_mosaic.version = 11 : i64} {
  func.func @fused_kernel(%arg0: i32, %arg1: memref<256x180xbf16, #tpu.memory_space<vmem>>, %arg2: memref<8x1152xbf16, #tpu.memory_space<vmem>>, %arg3: memref<180x640xbf16, #tpu.memory_space<vmem>>, %arg4: memref<1x640xf32, #tpu.memory_space<vmem>>, %arg5: memref<1152x120xbf16, #tpu.memory_space<vmem>>, %arg6: memref<1x120xf32, #tpu.memory_space<vmem>>, %arg7: memref<120x10xf32, #tpu.memory_space<vmem>>, %arg8: memref<1x10xf32, #tpu.memory_space<vmem>>, %arg9: memref<256x640xf32, #tpu.memory_space<vmem>>, %arg10: memref<8x120xf32, #tpu.memory_space<vmem>>, %arg11: memref<8x10xf32, #tpu.memory_space<vmem>>) attributes {dimension_semantics = [#tpu.dimension_semantics<parallel>], iteration_bounds = array<i64: 2>, scalar_prefetch = 0 : i64, scratch_operands = 0 : i64, tpu.core_type = #tpu.core_type<tc>, window_params = [{transform_indices = @transform_0, window_bounds = array<i64: 256, 180>}, {transform_indices = @transform_1, window_bounds = array<i64: 8, 1152>}, {pipeline_mode = #tpu.pipeline_mode<synchronous>, transform_indices = @transform_2, window_bounds = array<i64: 180, 640>}, {pipeline_mode = #tpu.pipeline_mode<synchronous>, transform_indices = @transform_3, window_bounds = array<i64: 1, 640>}, {pipeline_mode = #tpu.pipeline_mode<synchronous>, transform_indices = @transform_4, window_bounds = array<i64: 1152, 120>}, {pipeline_mode = #tpu.pipeline_mode<synchronous>, transform_indices = @transform_5, window_bounds = array<i64: 1, 120>}, {pipeline_mode = #tpu.pipeline_mode<synchronous>, transform_indices = @transform_6, window_bounds = array<i64: 120, 10>}, {pipeline_mode = #tpu.pipeline_mode<synchronous>, transform_indices = @transform_7, window_bounds = array<i64: 1, 10>}, {transform_indices = @transform_8, window_bounds = array<i64: 256, 640>}, {transform_indices = @transform_9, window_bounds = array<i64: 8, 120>}, {transform_indices = @transform_10, window_bounds = array<i64: 8, 10>}]} {
    %c0 = arith.constant 0 : index
    %c0_0 = arith.constant 0 : index
    %0 = vector.load %arg1[%c0, %c0_0] : memref<256x180xbf16, #tpu.memory_space<vmem>>, vector<256x180xbf16>
    %c0_1 = arith.constant 0 : index
    %c0_2 = arith.constant 0 : index
    %1 = vector.load %arg3[%c0_1, %c0_2] : memref<180x640xbf16, #tpu.memory_space<vmem>>, vector<180x640xbf16>
    %cst = arith.constant dense<0.000000e+00> : vector<256x640xf32>
    %2 = tpu.matmul %0, %1, %cst {dimension_numbers = #tpu.dot_dimension_numbers<[1], [0], [0], [1], [0, 0, 1, 1], [], []>} : vector<256x180xbf16>, vector<180x640xbf16>, vector<256x640xf32> -> vector<256x640xf32>
    %c0_3 = arith.constant 0 : index
    %c0_4 = arith.constant 0 : index
    %3 = vector.load %arg4[%c0_3, %c0_4] : memref<1x640xf32, #tpu.memory_space<vmem>>, vector<1x640xf32>
    %4 = vector.broadcast %3 : vector<1x640xf32> to vector<256x640xf32>
    %5 = arith.addf %2, %4 : vector<256x640xf32>
    %c0_5 = arith.constant 0 : index
    %c0_6 = arith.constant 0 : index
    %6 = vector.load %arg9[%c0_5, %c0_6] : memref<256x640xf32, #tpu.memory_space<vmem>>, vector<256x640xf32>
    tpu.vector_store %arg9[%c0_5, %c0_6], %5 {strides = array<i32>} : memref<256x640xf32, #tpu.memory_space<vmem>>, vector<256x640xf32>,
    %c0_7 = arith.constant 0 : index
    %c0_8 = arith.constant 0 : index
    %7 = vector.load %arg2[%c0_7, %c0_8] : memref<8x1152xbf16, #tpu.memory_space<vmem>>, vector<8x1152xbf16>
    %c0_9 = arith.constant 0 : index
    %c0_10 = arith.constant 0 : index
    %8 = vector.load %arg5[%c0_9, %c0_10] : memref<1152x120xbf16, #tpu.memory_space<vmem>>, vector<1152x120xbf16>
    %cst_11 = arith.constant dense<0.000000e+00> : vector<8x120xf32>
    %9 = tpu.matmul %7, %8, %cst_11 {dimension_numbers = #tpu.dot_dimension_numbers<[1], [0], [0], [1], [0, 0, 1, 1], [], []>} : vector<8x1152xbf16>, vector<1152x120xbf16>, vector<8x120xf32> -> vector<8x120xf32>
    %c0_12 = arith.constant 0 : index
    %c0_13 = arith.constant 0 : index
    %10 = vector.load %arg6[%c0_12, %c0_13] : memref<1x120xf32, #tpu.memory_space<vmem>>, vector<1x120xf32>
    %11 = vector.broadcast %10 : vector<1x120xf32> to vector<8x120xf32>
    %12 = arith.addf %9, %11 : vector<8x120xf32>
    %c0_14 = arith.constant 0 : index
    %c0_15 = arith.constant 0 : index
    %13 = vector.load %arg10[%c0_14, %c0_15] : memref<8x120xf32, #tpu.memory_space<vmem>>, vector<8x120xf32>
    tpu.vector_store %arg10[%c0_14, %c0_15], %12 {strides = array<i32>} : memref<8x120xf32, #tpu.memory_space<vmem>>, vector<8x120xf32>,
    %c0_16 = arith.constant 0 : index
    %c0_17 = arith.constant 0 : index
    %14 = vector.load %arg7[%c0_16, %c0_17] : memref<120x10xf32, #tpu.memory_space<vmem>>, vector<120x10xf32>
    %cst_18 = arith.constant dense<0.000000e+00> : vector<8x10xf32>
    %15 = tpu.matmul %12, %14, %cst_18 {dimension_numbers = #tpu.dot_dimension_numbers<[1], [0], [0], [1], [0, 0, 1, 1], [], []>} : vector<8x120xf32>, vector<120x10xf32>, vector<8x10xf32> -> vector<8x10xf32>
    %c0_19 = arith.constant 0 : index
    %c0_20 = arith.constant 0 : index
    %16 = vector.load %arg8[%c0_19, %c0_20] : memref<1x10xf32, #tpu.memory_space<vmem>>, vector<1x10xf32>
    %17 = vector.broadcast %16 : vector<1x10xf32> to vector<8x10xf32>
    %18 = arith.addf %15, %17 : vector<8x10xf32>
    %c0_21 = arith.constant 0 : index
    %c0_22 = arith.constant 0 : index
    %19 = vector.load %arg11[%c0_21, %c0_22] : memref<8x10xf32, #tpu.memory_space<vmem>>, vector<8x10xf32>
    tpu.vector_store %arg11[%c0_21, %c0_22], %18 {strides = array<i32>} : memref<8x10xf32, #tpu.memory_space<vmem>>, vector<8x10xf32>,
    return
  }
  func.func @transform_0(%arg0: i32) -> (i32, i32) {
    %c0_i32 = arith.constant 0 : i32
    %c0_i32_0 = arith.constant 0 : i32
    return %arg0, %c0_i32 : i32, i32
  }
  func.func @transform_1(%arg0: i32) -> (i32, i32) {
    %c0_i32 = arith.constant 0 : i32
    %c0_i32_0 = arith.constant 0 : i32
    return %arg0, %c0_i32 : i32, i32
  }
  func.func @transform_2(%arg0: i32) -> (i32, i32) {
    %c0_i32 = arith.constant 0 : i32
    %c0_i32_0 = arith.constant 0 : i32
    %c0_i32_1 = arith.constant 0 : i32
    return %c0_i32, %c0_i32_0 : i32, i32
  }
  func.func @transform_3(%arg0: i32) -> (i32, i32) {
    %c0_i32 = arith.constant 0 : i32
    %c0_i32_0 = arith.constant 0 : i32
    %c0_i32_1 = arith.constant 0 : i32
    return %c0_i32, %c0_i32_0 : i32, i32
  }
  func.func @transform_4(%arg0: i32) -> (i32, i32) {
    %c0_i32 = arith.constant 0 : i32
    %c0_i32_0 = arith.constant 0 : i32
    %c0_i32_1 = arith.constant 0 : i32
    return %c0_i32, %c0_i32_0 : i32, i32
  }
  func.func @transform_5(%arg0: i32) -> (i32, i32) {
    %c0_i32 = arith.constant 0 : i32
    %c0_i32_0 = arith.constant 0 : i32
    %c0_i32_1 = arith.constant 0 : i32
    return %c0_i32, %c0_i32_0 : i32, i32
  }
  func.func @transform_6(%arg0: i32) -> (i32, i32) {
    %c0_i32 = arith.constant 0 : i32
    %c0_i32_0 = arith.constant 0 : i32
    %c0_i32_1 = arith.constant 0 : i32
    return %c0_i32, %c0_i32_0 : i32, i32
  }
  func.func @transform_7(%arg0: i32) -> (i32, i32) {
    %c0_i32 = arith.constant 0 : i32
    %c0_i32_0 = arith.constant 0 : i32
    %c0_i32_1 = arith.constant 0 : i32
    return %c0_i32, %c0_i32_0 : i32, i32
  }
  func.func @transform_8(%arg0: i32) -> (i32, i32) {
    %c0_i32 = arith.constant 0 : i32
    %c0_i32_0 = arith.constant 0 : i32
    return %arg0, %c0_i32 : i32, i32
  }
  func.func @transform_9(%arg0: i32) -> (i32, i32) {
    %c0_i32 = arith.constant 0 : i32
    %c0_i32_0 = arith.constant 0 : i32
    return %arg0, %c0_i32 : i32, i32
  }
  func.func @transform_10(%arg0: i32) -> (i32, i32) {
    %c0_i32 = arith.constant 0 : i32
    %c0_i32_0 = arith.constant 0 : i32
    return %arg0, %c0_i32 : i32, i32
  }
}

</mosaic_0001>

<llo_original>
// kernel: model_forward.1
$region0: #{model_forward.1}
  #allocation0 [shape = 'u32[]', space=smem, size = 0x4, offset = 0x4, fixed_abs, tag = 'smem constant byte address 0x4 - core index']
  #allocation1 [shape = 'u32[144,128]{1,0:T(1,128)}', space=vmem, size = 0x12000, scoped, tag = 'internal scratch']
  %s0 = inlined_call_operand.vmem [shape: bf16[512,180], index: 0, kind: input, shape index: {}]
  %s1 = inlined_call_operand.vmem [shape: bf16[16,1152], index: 1, kind: input, shape index: {}]
  %s2 = inlined_call_operand.vmem [shape: bf16[180,640], index: 2, kind: input, shape index: {}]
  %s3 = inlined_call_operand.vmem [shape: f32[1,640], index: 3, kind: input, shape index: {}]
  %s4 = inlined_call_operand.vmem [shape: bf16[1152,120], index: 4, kind: input, shape index: {}]
  %s5 = inlined_call_operand.vmem [shape: f32[1,120], index: 5, kind: input, shape index: {}]
  %s6 = inlined_call_operand.vmem [shape: f32[120,10], index: 6, kind: input, shape index: {}]
  %s7 = inlined_call_operand.vmem [shape: f32[1,10], index: 7, kind: input, shape index: {}]
  %s8 = inlined_call_operand.vmem [shape: f32[512,640], index: 8, kind: output, shape index: {0}]
  %s9 = inlined_call_operand.hbm [shape: f32[16,120], index: 9, kind: output, shape index: {1}]
  %s10 = inlined_call_operand.hbm [shape: f32[16,10], index: 10, kind: output, shape index: {2}]
  %11 = xla_tuple %s8, %s9, %s10
  %s12 = sld [smem:[#allocation0]]
  $region81: #{model_forward.1} parent=0
    _
  %s14 = ssub.s32 1, %s12
  %s15 = scalar_select 0, %s14, %s12
  $region1: #{model_forward.1} parent=0
    #allocation2 [shape = 'u8[8192]{0}', space=vmem, size = 0x2000, scoped, tag = 'output window, operand 1']
    #allocation3 [shape = 's32[2]{0}', space=sflag, size = 0x8, scoped, tag = 'scoped memory for model_forward.1']
    #allocation4 [shape = 'u8[8192]{0}', space=vmem, size = 0x2000, scoped, tag = 'output window, operand 2']
    #allocation5 [shape = 's32[2]{0}', space=sflag, size = 0x8, scoped, tag = 'scoped memory for model_forward.1']
    %16 = vsyncpa [#allocation3], 0
    %s17 = scalar_lea.sflag [#allocation3], 1
    %18 = vsyncpa %s17, 0
    %19 = vsyncpa [#allocation5], 0
    %s20 = scalar_lea.sflag [#allocation5], 1
    %21 = vsyncpa %s20, 0
    loop: start=0, step=1, limit=4
    $region2: #{model_forward.1} parent=1 // loop_pre_header
      _
    $region3: #{model_forward.1} parent=1 // loop_header
      %s23 = sphi 0, %s27
      %p24 = scmp.ge.s32.totalorder %s23, 4
      %s33 = sphi 0, %s35
      %s36 = sphi 0, %s33
      %s37 = sphi 0, %s36
      %s53 = sphi 0, %s37
      %s59 = sphi 0, %s61
      %s62 = sphi 0, %s59
      %s63 = sphi 0, %s62
      %s79 = sphi 0, %s63
      %s83 = sphi 0, %s83
      %s85 = sphi 0, %s83
      %s86 = sphi 0, %s85
      %s100 = sphi 0, %s86
      %s104 = sphi 0, %s104
      %s106 = sphi 0, %s104
      %s107 = sphi 0, %s106
      %s121 = sphi 0, %s107
      %s125 = sphi 0, %s125
      %s127 = sphi 0, %s125
      %s128 = sphi 0, %s127
      %s142 = sphi 0, %s128
      %s146 = sphi 0, %s146
      %s148 = sphi 0, %s146
      %s149 = sphi 0, %s148
      %s163 = sphi 0, %s149
      %s167 = sphi 0, %s167
      %s169 = sphi 0, %s167
      %s170 = sphi 0, %s169
      %s184 = sphi 0, %s170
      %s188 = sphi 0, %s188
      %s190 = sphi 0, %s188
      %s191 = sphi 0, %s190
      %s205 = sphi 0, %s191
      %s211 = sphi 0, %s213
      %s214 = sphi 0, %s211
      %s215 = sphi 0, %s214
      %s231 = sphi 0, %s215
      %s237 = sphi 0, %s239
      %s240 = sphi 0, %s237
      %s241 = sphi 0, %s240
      %s257 = sphi 0, %s241
      %s263 = sphi 0, %s265
      %s266 = sphi 0, %s263
      %s267 = sphi 0, %s266
      %s283 = sphi 0, %s267
    $region4: #{model_forward.1} parent=1 // loop_header_branch
      %26 = sbr.rel (%p24) target = $region8
    $region5: #{model_forward.1} parent=1 // loop_body
      %s28 = ssub.s32 %s23, 1
      %s29 = ssub.s32 %s23, 2
      %s30 = sadd.s32 %s23, 1
      %s31 = ssub.s32 %s23, %s30
      %p32 = scmp.eq.s32.totalorder %s31, 0
      %s34 = sadd.s32 %s33, 1
      %s35 = scalar_select %p32, %s33, %s34
      %p38 = pneg %p32
      %p39 = scmp.eq.s32.totalorder %s23, 1
      %p40 = por %p38, %p39
      %p41 = scmp.ne.s32.totalorder %s33, %s36
      %p42 = scmp.eq.s32.totalorder %s23, 0
      %p43 = por %p41, %p42
      %p44 = scmp.ne.s32.totalorder %s33, %s36
      %p45 = scmp.eq.s32.totalorder %s28, 1
      %p46 = por %p44, %p45
      %p47 = scmp.ne.s32.totalorder %s36, %s37
      %p48 = scmp.eq.s32.totalorder %s28, 0
      %p49 = por %p47, %p48
      %p50 = scmp.ne.s32.totalorder %s36, %s37
      %p51 = scmp.eq.s32.totalorder %s29, 1
      %p52 = por %p50, %p51
      %p54 = scmp.ne.s32.totalorder %s37, %s53
      %p55 = scmp.eq.s32.totalorder %s29, 0
      %p56 = por %p54, %p55
      %s57 = ssub.s32 %s23, %s30
      %p58 = scmp.eq.s32.totalorder %s57, 0
      %s60 = sadd.s32 %s59, 1
      %s61 = scalar_select %p58, %s59, %s60
      %p64 = pneg %p58
      %p65 = scmp.eq.s32.totalorder %s23, 1
      %p66 = por %p64, %p65
      %p67 = scmp.ne.s32.totalorder %s59, %s62
      %p68 = scmp.eq.s32.totalorder %s23, 0
      %p69 = por %p67, %p68
      %p70 = scmp.ne.s32.totalorder %s59, %s62
      %p71 = scmp.eq.s32.totalorder %s28, 1
      %p72 = por %p70, %p71
      %p73 = scmp.ne.s32.totalorder %s62, %s63
      %p74 = scmp.eq.s32.totalorder %s28, 0
      %p75 = por %p73, %p74
      %p76 = scmp.ne.s32.totalorder %s62, %s63
      %p77 = scmp.eq.s32.totalorder %s29, 1
      %p78 = por %p76, %p77
      %p80 = scmp.ne.s32.totalorder %s63, %s79
      %p81 = scmp.eq.s32.totalorder %s29, 0
      %p82 = por %p80, %p81
      %s84 = sadd.s32 %s83, 1
      %p87 = scmp.eq.s32.totalorder %s23, 1
      %p88 = scmp.ne.s32.totalorder %s83, %s85
      %p89 = scmp.eq.s32.totalorder %s23, 0
      %p90 = por %p88, %p89
      %p91 = scmp.ne.s32.totalorder %s83, %s85
      %p92 = scmp.eq.s32.totalorder %s28, 1
      %p93 = por %p91, %p92
      %p94 = scmp.ne.s32.totalorder %s85, %s86
      %p95 = scmp.eq.s32.totalorder %s28, 0
      %p96 = por %p94, %p95
      %p97 = scmp.ne.s32.totalorder %s85, %s86
      %p98 = scmp.eq.s32.totalorder %s29, 1
      %p99 = por %p97, %p98
      %p101 = scmp.ne.s32.totalorder %s86, %s100
      %p102 = scmp.eq.s32.totalorder %s29, 0
      %p103 = por %p101, %p102
      %s105 = sadd.s32 %s104, 1
      %p108 = scmp.eq.s32.totalorder %s23, 1
      %p109 = scmp.ne.s32.totalorder %s104, %s106
      %p110 = scmp.eq.s32.totalorder %s23, 0
      %p111 = por %p109, %p110
      %p112 = scmp.ne.s32.totalorder %s104, %s106
      %p113 = scmp.eq.s32.totalorder %s28, 1
      %p114 = por %p112, %p113
      %p115 = scmp.ne.s32.totalorder %s106, %s107
      %p116 = scmp.eq.s32.totalorder %s28, 0
      %p117 = por %p115, %p116
      %p118 = scmp.ne.s32.totalorder %s106, %s107
      %p119 = scmp.eq.s32.totalorder %s29, 1
      %p120 = por %p118, %p119
      %p122 = scmp.ne.s32.totalorder %s107, %s121
      %p123 = scmp.eq.s32.totalorder %s29, 0
      %p124 = por %p122, %p123
      %s126 = sadd.s32 %s125, 1
      %p129 = scmp.eq.s32.totalorder %s23, 1
      %p130 = scmp.ne.s32.totalorder %s125, %s127
      %p131 = scmp.eq.s32.totalorder %s23, 0
      %p132 = por %p130, %p131
      %p133 = scmp.ne.s32.totalorder %s125, %s127
      %p134 = scmp.eq.s32.totalorder %s28, 1
      %p135 = por %p133, %p134
      %p136 = scmp.ne.s32.totalorder %s127, %s128
      %p137 = scmp.eq.s32.totalorder %s28, 0
      %p138 = por %p136, %p137
      %p139 = scmp.ne.s32.totalorder %s127, %s128
      %p140 = scmp.eq.s32.totalorder %s29, 1
      %p141 = por %p139, %p140
      %p143 = scmp.ne.s32.totalorder %s128, %s142
      %p144 = scmp.eq.s32.totalorder %s29, 0
      %p145 = por %p143, %p144
      %s147 = sadd.s32 %s146, 1
      %p150 = scmp.eq.s32.totalorder %s23, 1
      %p151 = scmp.ne.s32.totalorder %s146, %s148
      %p152 = scmp.eq.s32.totalorder %s23, 0
      %p153 = por %p151, %p152
      %p154 = scmp.ne.s32.totalorder %s146, %s148
      %p155 = scmp.eq.s32.totalorder %s28, 1
      %p156 = por %p154, %p155
      %p157 = scmp.ne.s32.totalorder %s148, %s149
      %p158 = scmp.eq.s32.totalorder %s28, 0
      %p159 = por %p157, %p158
      %p160 = scmp.ne.s32.totalorder %s148, %s149
      %p161 = scmp.eq.s32.totalorder %s29, 1
      %p162 = por %p160, %p161
      %p164 = scmp.ne.s32.totalorder %s149, %s163
      %p165 = scmp.eq.s32.totalorder %s29, 0
      %p166 = por %p164, %p165
      %s168 = sadd.s32 %s167, 1
      %p171 = scmp.eq.s32.totalorder %s23, 1
      %p172 = scmp.ne.s32.totalorder %s167, %s169
      %p173 = scmp.eq.s32.totalorder %s23, 0
      %p174 = por %p172, %p173
      %p175 = scmp.ne.s32.totalorder %s167, %s169
      %p176 = scmp.eq.s32.totalorder %s28, 1
      %p177 = por %p175, %p176
      %p178 = scmp.ne.s32.totalorder %s169, %s170
      %p179 = scmp.eq.s32.totalorder %s28, 0
      %p180 = por %p178, %p179
      %p181 = scmp.ne.s32.totalorder %s169, %s170
      %p182 = scmp.eq.s32.totalorder %s29, 1
      %p183 = por %p181, %p182
      %p185 = scmp.ne.s32.totalorder %s170, %s184
      %p186 = scmp.eq.s32.totalorder %s29, 0
      %p187 = por %p185, %p186
      %s189 = sadd.s32 %s188, 1
      %p192 = scmp.eq.s32.totalorder %s23, 1
      %p193 = scmp.ne.s32.totalorder %s188, %s190
      %p194 = scmp.eq.s32.totalorder %s23, 0
      %p195 = por %p193, %p194
      %p196 = scmp.ne.s32.totalorder %s188, %s190
      %p197 = scmp.eq.s32.totalorder %s28, 1
      %p198 = por %p196, %p197
      %p199 = scmp.ne.s32.totalorder %s190, %s191
      %p200 = scmp.eq.s32.totalorder %s28, 0
      %p201 = por %p199, %p200
      %p202 = scmp.ne.s32.totalorder %s190, %s191
      %p203 = scmp.eq.s32.totalorder %s29, 1
      %p204 = por %p202, %p203
      %p206 = scmp.ne.s32.totalorder %s191, %s205
      %p207 = scmp.eq.s32.totalorder %s29, 0
      %p208 = por %p206, %p207
      %s209 = ssub.s32 %s23, %s30
      %p210 = scmp.eq.s32.totalorder %s209, 0
      %s212 = sadd.s32 %s211, 1
      %s213 = scalar_select %p210, %s211, %s212
      %p216 = pneg %p210
      %p217 = scmp.eq.s32.totalorder %s23, 1
      %p218 = por %p216, %p217
      %p219 = scmp.ne.s32.totalorder %s211, %s214
      %p220 = scmp.eq.s32.totalorder %s23, 0
      %p221 = por %p219, %p220
      %p222 = scmp.ne.s32.totalorder %s211, %s214
      %p223 = scmp.eq.s32.totalorder %s28, 1
      %p224 = por %p222, %p223
      %p225 = scmp.ne.s32.totalorder %s214, %s215
      %p226 = scmp.eq.s32.totalorder %s28, 0
      %p227 = por %p225, %p226
      %p228 = scmp.ne.s32.totalorder %s214, %s215
      %p229 = scmp.eq.s32.totalorder %s29, 1
      %p230 = por %p228, %p229
      %p232 = scmp.ne.s32.totalorder %s215, %s231
      %p233 = scmp.eq.s32.totalorder %s29, 0
      %p234 = por %p232, %p233
      %s235 = ssub.s32 %s23, %s30
      %p236 = scmp.eq.s32.totalorder %s235, 0
      %s238 = sadd.s32 %s237, 1
      %s239 = scalar_select %p236, %s237, %s238
      %p242 = pneg %p236
      %p243 = scmp.eq.s32.totalorder %s23, 1
      %p244 = por %p242, %p243
      %p245 = scmp.ne.s32.totalorder %s237, %s240
      %p246 = scmp.eq.s32.totalorder %s23, 0
      %p247 = por %p245, %p246
      %p248 = scmp.ne.s32.totalorder %s237, %s240
      %p249 = scmp.eq.s32.totalorder %s28, 1
      %p250 = por %p248, %p249
      %p251 = scmp.ne.s32.totalorder %s240, %s241
      %p252 = scmp.eq.s32.totalorder %s28, 0
      %p253 = por %p251, %p252
      %p254 = scmp.ne.s32.totalorder %s240, %s241
      %p255 = scmp.eq.s32.totalorder %s29, 1
      %p256 = por %p254, %p255
      %p258 = scmp.ne.s32.totalorder %s241, %s257
      %p259 = scmp.eq.s32.totalorder %s29, 0
      %p260 = por %p258, %p259
      %s261 = ssub.s32 %s23, %s30
      %p262 = scmp.eq.s32.totalorder %s261, 0
      %s264 = sadd.s32 %s263, 1
      %s265 = scalar_select %p262, %s263, %s264
      %p268 = pneg %p262
      %p269 = scmp.eq.s32.totalorder %s23, 1
      %p270 = por %p268, %p269
      %p271 = scmp.ne.s32.totalorder %s263, %s266
      %p272 = scmp.eq.s32.totalorder %s23, 0
      %p273 = por %p271, %p272
      %p274 = scmp.ne.s32.totalorder %s263, %s266
      %p275 = scmp.eq.s32.totalorder %s28, 1
      %p276 = por %p274, %p275
      %p277 = scmp.ne.s32.totalorder %s266, %s267
      %p278 = scmp.eq.s32.totalorder %s28, 0
      %p279 = por %p277, %p278
      %p280 = scmp.ne.s32.totalorder %s266, %s267
      %p281 = scmp.eq.s32.totalorder %s29, 1
      %p282 = por %p280, %p281
      %p284 = scmp.ne.s32.totalorder %s267, %s283
      %p285 = scmp.eq.s32.totalorder %s29, 0
      %p286 = por %p284, %p285
      %p287 = scmp.le.s32.totalorder 1, %s23
      %p288 = scmp.lt.s32.totalorder %s23, 3
      %p289 = pnand %p287, %p288
      %p290 = pneg %p289
      // Predicated region
      $region9: #{model_forward.1} parent=5 // pred_check
        _
      $region10: #{model_forward.1} parent=5 // pred_check_branch
        %292 = sbr.rel (%p289) target = $region12
      $region11: #{model_forward.1} parent=5 // pred_region
        %s293 = ssub.s32 %s23, 1
        // Predicated region
        $region13: #{model_forward.1} parent=11 // pred_check
          %p294 = pneg %p96
        $region14: #{model_forward.1} parent=11 // pred_check_branch
          %296 = sbr.rel (%p294) target = $region16
        $region15: #{model_forward.1} parent=11 // pred_region
          _
        $region16: #{model_forward.1} parent=11 // pred_fallthru
          _
        // Predicated region
        $region17: #{model_forward.1} parent=11 // pred_check
          %p297 = pneg %p117
        $region18: #{model_forward.1} parent=11 // pred_check_branch
          %299 = sbr.rel (%p297) target = $region20
        $region19: #{model_forward.1} parent=11 // pred_region
          _
        $region20: #{model_forward.1} parent=11 // pred_fallthru
          _
        // Predicated region
        $region21: #{model_forward.1} parent=11 // pred_check
          %p300 = pneg %p138
        $region22: #{model_forward.1} parent=11 // pred_check_branch
          %302 = sbr.rel (%p300) target = $region24
        $region23: #{model_forward.1} parent=11 // pred_region
          _
        $region24: #{model_forward.1} parent=11 // pred_fallthru
          _
        // Predicated region
        $region25: #{model_forward.1} parent=11 // pred_check
          %p303 = pneg %p159
        $region26: #{model_forward.1} parent=11 // pred_check_branch
          %305 = sbr.rel (%p303) target = $region28
        $region27: #{model_forward.1} parent=11 // pred_region
          _
        $region28: #{model_forward.1} parent=11 // pred_fallthru
          _
        // Predicated region
        $region29: #{model_forward.1} parent=11 // pred_check
          %p306 = pneg %p180
        $region30: #{model_forward.1} parent=11 // pred_check_branch
          %308 = sbr.rel (%p306) target = $region32
        $region31: #{model_forward.1} parent=11 // pred_region
          _
        $region32: #{model_forward.1} parent=11 // pred_fallthru
          _
        // Predicated region
        $region33: #{model_forward.1} parent=11 // pred_check
          %p309 = pneg %p201
        $region34: #{model_forward.1} parent=11 // pred_check_branch
          %311 = sbr.rel (%p309) target = $region36
        $region35: #{model_forward.1} parent=11 // pred_region
          _
        $region36: #{model_forward.1} parent=11 // pred_fallthru
          _
      $region12: #{model_forward.1} parent=5 // pred_fallthru
        _
      %p312 = scmp.lt.s32.totalorder %s23, 2
      // Predicated region
      $region37: #{model_forward.1} parent=5 // pred_check
        %p313 = pneg %p312
      $region38: #{model_forward.1} parent=5 // pred_check_branch
        %315 = sbr.rel (%p313) target = $region40
      $region39: #{model_forward.1} parent=5 // pred_region
        // Predicated region
        $region41: #{model_forward.1} parent=39 // pred_check
          %p316 = pneg %p43
        $region42: #{model_forward.1} parent=39 // pred_check_branch
          %318 = sbr.rel (%p316) target = $region44
        $region43: #{model_forward.1} parent=39 // pred_region
          %s319 = smul.u32 32, %s23
          %p320 = scmp.lt.s32.totalorder %s319, 63
          %s321 = scalar_select %p320, %s319, 63
          %s322 = smul.addr %s321, 2
          %s323 = smul.addr %s322, 4
          %s324 = scalar_lea.vmem %s0, %s323
          %s325 = smul.u32 32, %s23
        $region44: #{model_forward.1} parent=39 // pred_fallthru
          _
        // Predicated region
        $region45: #{model_forward.1} parent=39 // pred_check
          %p326 = pneg %p69
        $region46: #{model_forward.1} parent=39 // pred_check_branch
          %328 = sbr.rel (%p326) target = $region48
        $region47: #{model_forward.1} parent=39 // pred_region
          %p329 = scmp.lt.s32.totalorder %s23, 1
          %s330 = scalar_select %p329, %s23, 1
          %s331 = smul.addr %s330, 9
          %s332 = smul.addr %s331, 4
          %s333 = scalar_lea.vmem %s1, %s332
        $region48: #{model_forward.1} parent=39 // pred_fallthru
          _
      $region40: #{model_forward.1} parent=5 // pred_fallthru
        _
      %p334 = scmp.le.s32.totalorder 1, %s23
      %p335 = scmp.lt.s32.totalorder %s23, 3
      %p336 = pnand %p334, %p335
      %p337 = pneg %p336
      // Predicated region
      $region49: #{model_forward.1} parent=5 // pred_check
        _
      $region50: #{model_forward.1} parent=5 // pred_check_branch
        %339 = sbr.rel (%p336) target = $region52
      $region51: #{model_forward.1} parent=5 // pred_region
        %s340 = ssub.s32 %s23, 1
        %s341 = smul.u32 32, %s28
        %p342 = scmp.lt.s32.totalorder %s341, 63
        %s343 = scalar_select %p342, %s341, 63
        %s344 = smul.addr %s343, 2
        %s345 = smul.addr %s344, 4
        %s346 = scalar_lea.vmem %s0, %s345
        %p347 = pneg %p49
        %p348 = pneg %p46
        %p349 = scmp.lt.s32.totalorder %s28, 1
        %s350 = scalar_select %p349, %s28, 1
        %s351 = smul.addr %s350, 9
        %s352 = smul.addr %s351, 4
        %s353 = scalar_lea.vmem %s1, %s352
        %p354 = pneg %p75
        %p355 = pneg %p72
        %p356 = pneg %p96
        %p357 = pneg %p93
        %p358 = pneg %p117
        %p359 = pneg %p114
        %p360 = pneg %p138
        %p361 = pneg %p135
        %p362 = pneg %p159
        %p363 = pneg %p156
        %p364 = pneg %p180
        %p365 = pneg %p177
        %p366 = pneg %p201
        %p367 = pneg %p198
        %p368 = pneg %p227
        %p369 = pneg %p224
        %s370 = smul.u32 32, %s28
        %p371 = scmp.lt.s32.totalorder %s370, 63
        %s372 = scalar_select %p371, %s370, 63
        %s373 = smul.addr %s372, 5
        %s374 = smul.addr %s373, 8
        %s375 = scalar_lea.vmem %s8, %s374
        %p376 = pneg %p253
        %p377 = pneg %p250
        %s378 = sand.u32 %s240, 1
        %s379 = scalar_lea.sflag [#allocation3], %s378
        %s380 = sand.u32 %s240, 1
        %s381 = smul.addr %s380, 8
        %s382 = scalar_lea.vmem [#allocation2], %s381
        %p383 = pneg %p279
        %p384 = pneg %p276
        %s385 = sand.u32 %s266, 1
        %s386 = scalar_lea.sflag [#allocation5], %s385
        %s387 = sand.u32 %s266, 1
        %s388 = smul.addr %s387, 8
        %s389 = scalar_lea.vmem [#allocation4], %s388
        %s390 = smul.u32 32, %s28
        %p391 = scmp.lt.s32.totalorder %s390, 63
        %s392 = scalar_select %p391, %s390, 63
        %s393 = smul.addr %s392, 2
        %s394 = smul.addr %s393, 4
        %s395 = scalar_lea.vmem %s0, %s394
        %s396 = smul.u32 32, %s28
        %p397 = scmp.lt.s32.totalorder %s28, 1
        %s398 = scalar_select %p397, %s28, 1
        %s399 = smul.addr %s398, 9
        %s400 = smul.addr %s399, 4
        %s401 = scalar_lea.vmem %s1, %s400
        %s402 = smul.u32 32, %s28
        %p403 = scmp.lt.s32.totalorder %s402, 63
        %s404 = scalar_select %p403, %s402, 63
        %s405 = smul.addr %s404, 5
        %s406 = smul.addr %s405, 8
        %s407 = scalar_lea.vmem %s8, %s406
        %s408 = smul.u32 32, %s28
        %v410 = vld [vmem:[%s395] sm:$0xff]
        %v411 = vld [vmem:[%s395 + $0x8] sm:$0xff]
        %v412 = vld [vmem:[%s395 + $0x10] sm:$0xff]
        %v413 = vld [vmem:[%s395 + $0x18] sm:$0xff]
        %v414 = vld [vmem:[%s395 + $0x20] sm:$0xff]
        %v415 = vld [vmem:[%s395 + $0x28] sm:$0xff]
        %v416 = vld [vmem:[%s395 + $0x30] sm:$0xff]
        %v417 = vld [vmem:[%s395 + $0x38] sm:$0xff]
        %v418 = vld [vmem:[%s395 + $0x40] sm:$0xff]
        %v419 = vld [vmem:[%s395 + $0x48] sm:$0xff]
        %v420 = vld [vmem:[%s395 + $0x50] sm:$0xff]
        %v421 = vld [vmem:[%s395 + $0x58] sm:$0xff]
        %v422 = vld [vmem:[%s395 + $0x60] sm:$0xff]
        %v423 = vld [vmem:[%s395 + $0x68] sm:$0xff]
        %v424 = vld [vmem:[%s395 + $0x70] sm:$0xff]
        %v425 = vld [vmem:[%s395 + $0x78] sm:$0xff]
        %v426 = vld [vmem:[%s395 + $0x80] sm:$0xff]
        %v427 = vld [vmem:[%s395 + $0x88] sm:$0xff]
        %v428 = vld [vmem:[%s395 + $0x90] sm:$0xff]
        %v429 = vld [vmem:[%s395 + $0x98] sm:$0xff]
        %v430 = vld [vmem:[%s395 + $0xa0] sm:$0xff]
        %v431 = vld [vmem:[%s395 + $0xa8] sm:$0xff]
        %v432 = vld [vmem:[%s395 + $0xb0] sm:$0xff]
        %v433 = vld [vmem:[%s395 + $0xb8] sm:$0xff]
        %v434 = vld [vmem:[%s395 + $0xc0] sm:$0xff]
        %v435 = vld [vmem:[%s395 + $0xc8] sm:$0xff]
        %v436 = vld [vmem:[%s395 + $0xd0] sm:$0xff]
        %v437 = vld [vmem:[%s395 + $0xd8] sm:$0xff]
        %v438 = vld [vmem:[%s395 + $0xe0] sm:$0xff]
        %v439 = vld [vmem:[%s395 + $0xe8] sm:$0xff]
        %v440 = vld [vmem:[%s395 + $0xf0] sm:$0xff]
        %v441 = vld [vmem:[%s395 + $0xf8] sm:$0xff]
        %v442 = vld [vmem:[%s2] sm:$0xff]
        %v443 = vld [vmem:[%s2 + $0x8] sm:$0xff]
        %v444 = vld [vmem:[%s2 + $0x10] sm:$0xf]
        %v445 = vld [vmem:[%s2 + $0x14] sm:$0xff]
        %v446 = vld [vmem:[%s2 + $0x1c] sm:$0xff]
        %v447 = vld [vmem:[%s2 + $0x24] sm:$0xf]
        %v448 = vld [vmem:[%s2 + $0x28] sm:$0xff]
        %v449 = vld [vmem:[%s2 + $0x30] sm:$0xff]
        %v450 = vld [vmem:[%s2 + $0x38] sm:$0xf]
        %v451 = vld [vmem:[%s2 + $0x3c] sm:$0xff]
        %v452 = vld [vmem:[%s2 + $0x44] sm:$0xff]
        %v453 = vld [vmem:[%s2 + $0x4c] sm:$0xf]
        %v454 = vld [vmem:[%s2 + $0x50] sm:$0xff]
        %v455 = vld [vmem:[%s2 + $0x58] sm:$0xff]
        %v456 = vld [vmem:[%s2 + $0x60] sm:$0xf]
        %v457 = vld [vmem:[%s2 + $0x64] sm:$0xff]
        %v458 = vld [vmem:[%s2 + $0x6c] sm:$0xff]
        %v459 = vld [vmem:[%s2 + $0x74] sm:$0xf]
        %v460 = vld [vmem:[%s2 + $0x78] sm:$0xff]
        %v461 = vld [vmem:[%s2 + $0x80] sm:$0xff]
        %v462 = vld [vmem:[%s2 + $0x88] sm:$0xf]
        %v463 = vld [vmem:[%s2 + $0x8c] sm:$0xff]
        %v464 = vld [vmem:[%s2 + $0x94] sm:$0xff]
        %v465 = vld [vmem:[%s2 + $0x9c] sm:$0xf]
        %v466 = vld [vmem:[%s2 + $0xa0] sm:$0xff]
        %v467 = vld [vmem:[%s2 + $0xa8] sm:$0xff]
        %v468 = vld [vmem:[%s2 + $0xb0] sm:$0xf]
        %v469 = vld [vmem:[%s2 + $0xb4] sm:$0xff]
        %v470 = vld [vmem:[%s2 + $0xbc] sm:$0xff]
        %v471 = vld [vmem:[%s2 + $0xc4] sm:$0xf]
        %v472 = vld [vmem:[%s2 + $0xc8] sm:$0xff]
        %v473 = vld [vmem:[%s2 + $0xd0] sm:$0xff]
        %v474 = vld [vmem:[%s2 + $0xd8] sm:$0xf]
        %v475 = vld [vmem:[%s2 + $0xdc] sm:$0xff]
        %v476 = vld [vmem:[%s2 + $0xe4] sm:$0xff]
        %v477 = vld [vmem:[%s2 + $0xec] sm:$0xf]
        %v478 = vld [vmem:[%s2 + $0xf0] sm:$0xff]
        %v479 = vld [vmem:[%s2 + $0xf8] sm:$0xff]
        %v480 = vld [vmem:[%s2 + $0x100] sm:$0xf]
        %v481 = vld [vmem:[%s2 + $0x104] sm:$0xff]
        %v482 = vld [vmem:[%s2 + $0x10c] sm:$0xff]
        %v483 = vld [vmem:[%s2 + $0x114] sm:$0xf]
        %v484 = vld [vmem:[%s2 + $0x118] sm:$0xff]
        %v485 = vld [vmem:[%s2 + $0x120] sm:$0xff]
        %v486 = vld [vmem:[%s2 + $0x128] sm:$0xf]
        %v487 = vld [vmem:[%s2 + $0x12c] sm:$0xff]
        %v488 = vld [vmem:[%s2 + $0x134] sm:$0xff]
        %v489 = vld [vmem:[%s2 + $0x13c] sm:$0xf]
        %v490 = vld [vmem:[%s2 + $0x140] sm:$0xff]
        %v491 = vld [vmem:[%s2 + $0x148] sm:$0xff]
        %v492 = vld [vmem:[%s2 + $0x150] sm:$0xf]
        %v493 = vld [vmem:[%s2 + $0x154] sm:$0xff]
        %v494 = vld [vmem:[%s2 + $0x15c] sm:$0xff]
        %v495 = vld [vmem:[%s2 + $0x164] sm:$0xf]
        %v496 = vld [vmem:[%s2 + $0x168] sm:$0xff]
        %v497 = vld [vmem:[%s2 + $0x170] sm:$0xff]
        %v498 = vld [vmem:[%s2 + $0x178] sm:$0xf]
        %v499 = vld [vmem:[%s2 + $0x17c] sm:$0xff]
        %v500 = vld [vmem:[%s2 + $0x184] sm:$0xff]
        %v501 = vld [vmem:[%s2 + $0x18c] sm:$0xf]
        %v502 = vld [vmem:[%s2 + $0x190] sm:$0xff]
        %v503 = vld [vmem:[%s2 + $0x198] sm:$0xff]
        %v504 = vld [vmem:[%s2 + $0x1a0] sm:$0xf]
        %v505 = vld [vmem:[%s2 + $0x1a4] sm:$0xff]
        %v506 = vld [vmem:[%s2 + $0x1ac] sm:$0xff]
        %v507 = vld [vmem:[%s2 + $0x1b4] sm:$0xf]
        %v508 = vld [vmem:[%s2 + $0x1b8] sm:$0x33]
        %v509 = vld [vmem:[%s2 + $0x1c0] sm:$0x33]
        %v510 = vld [vmem:[%s2 + $0x1c8] sm:$0x3]
        %v511 = vld [vmem:[%s3] sm:$0x1f]
        %v513 = vlaneseq
        %v514 = vshrl.u32 %v513, 7
        %v515 = vsub.s32 0, %v514
        %v516 = vrot.slane %v511, %v515
        %v517 = vlaneseq
        %v518 = vshrl.u32 %v517, 7
        %v519 = vsub.s32 1, %v518
        %v520 = vrot.slane %v511, %v519
        %v521 = vlaneseq
        %v522 = vshrl.u32 %v521, 7
        %v523 = vsub.s32 2, %v522
        %v524 = vrot.slane %v511, %v523
        %v525 = vlaneseq
        %v526 = vshrl.u32 %v525, 7
        %v527 = vsub.s32 3, %v526
        %v528 = vrot.slane %v511, %v527
        %v529 = vlaneseq
        %v530 = vshrl.u32 %v529, 7
        %v531 = vsub.s32 4, %v530
        %v532 = vrot.slane %v511, %v531
        %v570 = vunpack.c.l.b16 %v410
        %v571 = vunpack.c.h.b16 %v410
        %v572 = vunpack.c.l.b16 %v411
        %v573 = vunpack.c.h.b16 %v411
        %v574 = vunpack.c.l.b16 %v412
        %v575 = vunpack.c.h.b16 %v412
        %v576 = vunpack.c.l.b16 %v413
        %v577 = vunpack.c.h.b16 %v413
        %v578 = vunpack.c.l.b16 %v414
        %v579 = vunpack.c.h.b16 %v414
        %v580 = vunpack.c.l.b16 %v415
        %v581 = vunpack.c.h.b16 %v415
        %v582 = vunpack.c.l.b16 %v416
        %v583 = vunpack.c.h.b16 %v416
        %v584 = vunpack.c.l.b16 %v417
        %v585 = vunpack.c.h.b16 %v417
        %v586 = vunpack.c.l.b16 %v418
        %v587 = vunpack.c.h.b16 %v418
        %v588 = vunpack.c.l.b16 %v419
        %v589 = vunpack.c.h.b16 %v419
        %v590 = vunpack.c.l.b16 %v420
        %v591 = vunpack.c.h.b16 %v420
        %v592 = vunpack.c.l.b16 %v421
        %v593 = vunpack.c.h.b16 %v421
        %v594 = vunpack.c.l.b16 %v422
        %v595 = vunpack.c.h.b16 %v422
        %v596 = vunpack.c.l.b16 %v423
        %v597 = vunpack.c.h.b16 %v423
        %v598 = vunpack.c.l.b16 %v424
        %v599 = vunpack.c.h.b16 %v424
        %v600 = vunpack.c.l.b16 %v425
        %v601 = vunpack.c.h.b16 %v425
        %v602 = vunpack.c.l.b16 %v426
        %v603 = vunpack.c.h.b16 %v426
        %v604 = vunpack.c.l.b16 %v427
        %v605 = vunpack.c.h.b16 %v427
        %v606 = vunpack.c.l.b16 %v428
        %v607 = vunpack.c.h.b16 %v428
        %v608 = vunpack.c.l.b16 %v429
        %v609 = vunpack.c.h.b16 %v429
        %v610 = vunpack.c.l.b16 %v430
        %v611 = vunpack.c.h.b16 %v430
        %v612 = vunpack.c.l.b16 %v431
        %v613 = vunpack.c.h.b16 %v431
        %v614 = vunpack.c.l.b16 %v432
        %v615 = vunpack.c.h.b16 %v432
        %v616 = vunpack.c.l.b16 %v433
        %v617 = vunpack.c.h.b16 %v433
        %v618 = vunpack.c.l.b16 %v434
        %v619 = vunpack.c.h.b16 %v434
        %v620 = vunpack.c.l.b16 %v435
        %v621 = vunpack.c.h.b16 %v435
        %v622 = vunpack.c.l.b16 %v436
        %v623 = vunpack.c.h.b16 %v436
        %v624 = vunpack.c.l.b16 %v437
        %v625 = vunpack.c.h.b16 %v437
        %v626 = vunpack.c.l.b16 %v438
        %v627 = vunpack.c.h.b16 %v438
        %v628 = vunpack.c.l.b16 %v439
        %v629 = vunpack.c.h.b16 %v439
        %v630 = vunpack.c.l.b16 %v440
        %v631 = vunpack.c.h.b16 %v440
        %v632 = vunpack.c.l.b16 %v441
        %v633 = vunpack.c.h.b16 %v441
        %v634 = vpack.c.b16 %v572, %v570
        %v635 = vpack.c.b16 %v573, %v571
        %v636 = vpack.c.b16 %v576, %v574
        %v637 = vpack.c.b16 %v577, %v575
        %v638 = vpack.c.b16 %v580, %v578
        %v639 = vpack.c.b16 %v581, %v579
        %v640 = vpack.c.b16 %v584, %v582
        %v641 = vpack.c.b16 %v585, %v583
        %v642 = vpack.c.b16 %v588, %v586
        %v643 = vpack.c.b16 %v589, %v587
        %v644 = vpack.c.b16 %v592, %v590
        %v645 = vpack.c.b16 %v593, %v591
        %v646 = vpack.c.b16 %v596, %v594
        %v647 = vpack.c.b16 %v597, %v595
        %v648 = vpack.c.b16 %v600, %v598
        %v649 = vpack.c.b16 %v601, %v599
        %v650 = vpack.c.b16 %v604, %v602
        %v651 = vpack.c.b16 %v605, %v603
        %v652 = vpack.c.b16 %v608, %v606
        %v653 = vpack.c.b16 %v609, %v607
        %v654 = vpack.c.b16 %v612, %v610
        %v655 = vpack.c.b16 %v613, %v611
        %v656 = vpack.c.b16 %v616, %v614
        %v657 = vpack.c.b16 %v617, %v615
        %v658 = vpack.c.b16 %v620, %v618
        %v659 = vpack.c.b16 %v621, %v619
        %v660 = vpack.c.b16 %v624, %v622
        %v661 = vpack.c.b16 %v625, %v623
        %v662 = vpack.c.b16 %v628, %v626
        %v663 = vpack.c.b16 %v629, %v627
        %v664 = vpack.c.b16 %v632, %v630
        %v665 = vpack.c.b16 %v633, %v631
        %v751 = vunpack.c.l.b16 %v442
        %v752 = vunpack.c.h.b16 %v442
        %v753 = vunpack.c.l.b16 %v443
        %v754 = vunpack.c.h.b16 %v443
        %v755 = vunpack.c.l.b16 %v444
        %v756 = vunpack.c.l.b16 %v445
        %v757 = vunpack.c.h.b16 %v445
        %v758 = vunpack.c.l.b16 %v446
        %v759 = vunpack.c.h.b16 %v446
        %v760 = vunpack.c.l.b16 %v447
        %v761 = vunpack.c.l.b16 %v448
        %v762 = vunpack.c.h.b16 %v448
        %v763 = vunpack.c.l.b16 %v449
        %v764 = vunpack.c.h.b16 %v449
        %v765 = vunpack.c.l.b16 %v450
        %v766 = vunpack.c.l.b16 %v451
        %v767 = vunpack.c.h.b16 %v451
        %v768 = vunpack.c.l.b16 %v452
        %v769 = vunpack.c.h.b16 %v452
        %v770 = vunpack.c.l.b16 %v453
        %v771 = vunpack.c.l.b16 %v454
        %v772 = vunpack.c.h.b16 %v454
        %v773 = vunpack.c.l.b16 %v455
        %v774 = vunpack.c.h.b16 %v455
        %v775 = vunpack.c.l.b16 %v456
        %v776 = vunpack.c.l.b16 %v457
        %v777 = vunpack.c.h.b16 %v457
        %v778 = vunpack.c.l.b16 %v458
        %v779 = vunpack.c.h.b16 %v458
        %v780 = vunpack.c.l.b16 %v459
        %v781 = vunpack.c.l.b16 %v460
        %v782 = vunpack.c.h.b16 %v460
        %v783 = vunpack.c.l.b16 %v461
        %v784 = vunpack.c.h.b16 %v461
        %v785 = vunpack.c.l.b16 %v462
        %v786 = vunpack.c.l.b16 %v463
        %v787 = vunpack.c.h.b16 %v463
        %v788 = vunpack.c.l.b16 %v464
        %v789 = vunpack.c.h.b16 %v464
        %v790 = vunpack.c.l.b16 %v465
        %v791 = vunpack.c.l.b16 %v466
        %v792 = vunpack.c.h.b16 %v466
        %v793 = vunpack.c.l.b16 %v467
        %v794 = vunpack.c.h.b16 %v467
        %v795 = vunpack.c.l.b16 %v468
        %v796 = vunpack.c.l.b16 %v469
        %v797 = vunpack.c.h.b16 %v469
        %v798 = vunpack.c.l.b16 %v470
        %v799 = vunpack.c.h.b16 %v470
        %v800 = vunpack.c.l.b16 %v471
        %v801 = vunpack.c.l.b16 %v472
        %v802 = vunpack.c.h.b16 %v472
        %v803 = vunpack.c.l.b16 %v473
        %v804 = vunpack.c.h.b16 %v473
        %v805 = vunpack.c.l.b16 %v474
        %v806 = vunpack.c.l.b16 %v475
        %v807 = vunpack.c.h.b16 %v475
        %v808 = vunpack.c.l.b16 %v476
        %v809 = vunpack.c.h.b16 %v476
        %v810 = vunpack.c.l.b16 %v477
        %v811 = vunpack.c.l.b16 %v478
        %v812 = vunpack.c.h.b16 %v478
        %v813 = vunpack.c.l.b16 %v479
        %v814 = vunpack.c.h.b16 %v479
        %v815 = vunpack.c.l.b16 %v480
        %v816 = vunpack.c.l.b16 %v481
        %v817 = vunpack.c.h.b16 %v481
        %v818 = vunpack.c.l.b16 %v482
        %v819 = vunpack.c.h.b16 %v482
        %v820 = vunpack.c.l.b16 %v483
        %v821 = vunpack.c.l.b16 %v484
        %v822 = vunpack.c.h.b16 %v484
        %v823 = vunpack.c.l.b16 %v485
        %v824 = vunpack.c.h.b16 %v485
        %v825 = vunpack.c.l.b16 %v486
        %v826 = vunpack.c.l.b16 %v487
        %v827 = vunpack.c.h.b16 %v487
        %v828 = vunpack.c.l.b16 %v488
        %v829 = vunpack.c.h.b16 %v488
        %v830 = vunpack.c.l.b16 %v489
        %v831 = vunpack.c.l.b16 %v490
        %v832 = vunpack.c.h.b16 %v490
        %v833 = vunpack.c.l.b16 %v491
        %v834 = vunpack.c.h.b16 %v491
        %v835 = vunpack.c.l.b16 %v492
        %v836 = vunpack.c.l.b16 %v493
        %v837 = vunpack.c.h.b16 %v493
        %v838 = vunpack.c.l.b16 %v494
        %v839 = vunpack.c.h.b16 %v494
        %v840 = vunpack.c.l.b16 %v495
        %v841 = vunpack.c.l.b16 %v496
        %v842 = vunpack.c.h.b16 %v496
        %v843 = vunpack.c.l.b16 %v497
        %v844 = vunpack.c.h.b16 %v497
        %v845 = vunpack.c.l.b16 %v498
        %v846 = vunpack.c.l.b16 %v499
        %v847 = vunpack.c.h.b16 %v499
        %v848 = vunpack.c.l.b16 %v500
        %v849 = vunpack.c.h.b16 %v500
        %v850 = vunpack.c.l.b16 %v501
        %v851 = vunpack.c.l.b16 %v502
        %v852 = vunpack.c.h.b16 %v502
        %v853 = vunpack.c.l.b16 %v503
        %v854 = vunpack.c.h.b16 %v503
        %v855 = vunpack.c.l.b16 %v504
        %v856 = vunpack.c.l.b16 %v505
        %v857 = vunpack.c.h.b16 %v505
        %v858 = vunpack.c.l.b16 %v506
        %v859 = vunpack.c.h.b16 %v506
        %v860 = vunpack.c.l.b16 %v507
        %v861 = vunpack.c.l.b16 %v508
        %v862 = vunpack.c.h.b16 %v508
        %v863 = vunpack.c.l.b16 %v509
        %v864 = vunpack.c.h.b16 %v509
        %v865 = vunpack.c.l.b16 %v510
        %v866 = vpack.c.b16 %v756, %v751
        %v867 = vpack.c.b16 %v757, %v752
        %v868 = vpack.c.b16 %v758, %v753
        %v869 = vpack.c.b16 %v759, %v754
        %v870 = vpack.c.b16 %v760, %v755
        %v871 = vpack.c.b16 %v766, %v761
        %v872 = vpack.c.b16 %v767, %v762
        %v873 = vpack.c.b16 %v768, %v763
        %v874 = vpack.c.b16 %v769, %v764
        %v875 = vpack.c.b16 %v770, %v765
        %v876 = vpack.c.b16 %v776, %v771
        %v877 = vpack.c.b16 %v777, %v772
        %v878 = vpack.c.b16 %v778, %v773
        %v879 = vpack.c.b16 %v779, %v774
        %v880 = vpack.c.b16 %v780, %v775
        %v881 = vpack.c.b16 %v786, %v781
        %v882 = vpack.c.b16 %v787, %v782
        %v883 = vpack.c.b16 %v788, %v783
        %v884 = vpack.c.b16 %v789, %v784
        %v885 = vpack.c.b16 %v790, %v785
        %v886 = vpack.c.b16 %v796, %v791
        %v887 = vpack.c.b16 %v797, %v792
        %v888 = vpack.c.b16 %v798, %v793
        %v889 = vpack.c.b16 %v799, %v794
        %v890 = vpack.c.b16 %v800, %v795
        %v891 = vpack.c.b16 %v806, %v801
        %v892 = vpack.c.b16 %v807, %v802
        %v893 = vpack.c.b16 %v808, %v803
        %v894 = vpack.c.b16 %v809, %v804
        %v895 = vpack.c.b16 %v810, %v805
        %v896 = vpack.c.b16 %v816, %v811
        %v897 = vpack.c.b16 %v817, %v812
        %v898 = vpack.c.b16 %v818, %v813
        %v899 = vpack.c.b16 %v819, %v814
        %v900 = vpack.c.b16 %v820, %v815
        %v901 = vpack.c.b16 %v826, %v821
        %v902 = vpack.c.b16 %v827, %v822
        %v903 = vpack.c.b16 %v828, %v823
        %v904 = vpack.c.b16 %v829, %v824
        %v905 = vpack.c.b16 %v830, %v825
        %v906 = vpack.c.b16 %v836, %v831
        %v907 = vpack.c.b16 %v837, %v832
        %v908 = vpack.c.b16 %v838, %v833
        %v909 = vpack.c.b16 %v839, %v834
        %v910 = vpack.c.b16 %v840, %v835
        %v911 = vpack.c.b16 %v846, %v841
        %v912 = vpack.c.b16 %v847, %v842
        %v913 = vpack.c.b16 %v848, %v843
        %v914 = vpack.c.b16 %v849, %v844
        %v915 = vpack.c.b16 %v850, %v845
        %v916 = vpack.c.b16 %v856, %v851
        %v917 = vpack.c.b16 %v857, %v852
        %v918 = vpack.c.b16 %v858, %v853
        %v919 = vpack.c.b16 %v859, %v854
        %v920 = vpack.c.b16 %v860, %v855
        %v921 = vpack.c.b16 %v861, %v861
        %v922 = vpack.c.b16 %v862, %v862
        %v923 = vpack.c.b16 %v863, %v863
        %v924 = vpack.c.b16 %v864, %v864
        %v925 = vpack.c.b16 %v865, %v865
        %vm981 = vcmask 424960
        %v983 = vsel %vm981, %v635, 0
        %v986 = vsel %vm981, %v637, 0
        %v989 = vsel %vm981, %v639, 0
        %v992 = vsel %vm981, %v641, 0
        %v995 = vsel %vm981, %v643, 0
        %v998 = vsel %vm981, %v645, 0
        %v1001 = vsel %vm981, %v647, 0
        %v1004 = vsel %vm981, %v649, 0
        %v1007 = vsel %vm981, %v651, 0
        %v1010 = vsel %vm981, %v653, 0
        %v1013 = vsel %vm981, %v655, 0
        %v1016 = vsel %vm981, %v657, 0
        %v1019 = vsel %vm981, %v659, 0
        %v1022 = vsel %vm981, %v661, 0
        %v1025 = vsel %vm981, %v663, 0
        %v1028 = vsel %vm981, %v665, 0
        %vm1030 = vcmask 1041408
        %v1032 = vsel %vm1030, %v921, 0
        %v1035 = vsel %vm1030, %v922, 0
        %v1038 = vsel %vm1030, %v923, 0
        %v1041 = vsel %vm1030, %v924, 0
        %v1044 = vsel %vm1030, %v925, 0
        %1046 = vmatprep.subr.bf16.mxu0 %v867
        %1047 = vmatpush1.bf16.msra.mxu0 %v866
        %1048 = vmatprep.subr.bf16.mxu0 %v872
        %1049 = vmatpush1.bf16.msra.mxu0 %v871
        %1050 = vmatprep.subr.bf16.mxu0 %v877
        %1051 = vmatpush1.bf16.msra.mxu0 %v876
        %1052 = vmatprep.subr.bf16.mxu0 %v882
        %1053 = vmatpush1.bf16.msra.mxu0 %v881
        %1054 = vmatprep.subr.bf16.mxu0 %v887
        %1055 = vmatpush1.bf16.msra.mxu0 %v886
        %1056 = vmatprep.subr.bf16.mxu0 %v892
        %1057 = vmatpush1.bf16.msra.mxu0 %v891
        %1058 = vmatprep.subr.bf16.mxu0 %v897
        %1059 = vmatpush1.bf16.msra.mxu0 %v896
        %1060 = vmatprep.subr.bf16.mxu0 %v902
        %1061 = vmatpush1.bf16.msra.mxu0 %v901
        %1062 = vmatprep.subr.bf16.mxu0 %v907
        %1063 = vmatpush1.bf16.msra.mxu0 %v906
        %1064 = vmatprep.subr.bf16.mxu0 %v912
        %1065 = vmatpush1.bf16.msra.mxu0 %v911
        %1066 = vmatprep.subr.bf16.mxu0 %v917
        %1067 = vmatpush1.bf16.msra.mxu0 %v916
        %1068 = vmatprep.subr.bf16.mxu0 %v1035
        %1069 = vmatpush1.bf16.msra.mxu0 %v1032
        %1070 = vmatprep.subr.bf16.mxu0 0
        %1071 = vmatpush1.bf16.msra.mxu0 0
        %1072 = vmatprep.subr.bf16.mxu0 0
        %1073 = vmatpush1.bf16.msra.mxu0 0
        %1074 = vmatprep.subr.bf16.mxu0 0
        %1075 = vmatpush1.bf16.msra.mxu0 0
        %1076 = vmatprep.subr.bf16.mxu0 0
        %1077 = vmatpush1.bf16.msra.mxu0 0
        %1078 = vmatprep.mubr.bf16.mxu0 %v983
        %1079 = vmatmul.mubr.bf16.gmra.mrb[0].mxu0 %v634
        %v1080 = vpop.f32.mrb[0].mxu0
        %v1081 = vadd.f32 %v516, %v1080
        %v1082 = vpop.f32.mrb[0].mxu0
        %v1083 = vadd.f32 %v520, %v1082
        %v1084 = vpop.f32.mrb[0].mxu0
        %v1085 = vadd.f32 %v516, %v1084
        %v1086 = vpop.f32.mrb[0].mxu0
        %v1087 = vadd.f32 %v520, %v1086
        %1088 = vmatprep.mubr.bf16.mxu0 %v986
        %1089 = vmatmul.mubr.bf16.gmra.mrb[0].mxu0 %v636
        %v1090 = vpop.f32.mrb[0].mxu0
        %v1091 = vadd.f32 %v516, %v1090
        %v1092 = vpop.f32.mrb[0].mxu0
        %v1093 = vadd.f32 %v520, %v1092
        %v1094 = vpop.f32.mrb[0].mxu0
        %v1095 = vadd.f32 %v516, %v1094
        %v1096 = vpop.f32.mrb[0].mxu0
        %v1097 = vadd.f32 %v520, %v1096
        %1098 = vmatprep.mubr.bf16.mxu0 %v989
        %1099 = vmatmul.mubr.bf16.gmra.mrb[0].mxu0 %v638
        %v1100 = vpop.f32.mrb[0].mxu0
        %v1101 = vadd.f32 %v516, %v1100
        %v1102 = vpop.f32.mrb[0].mxu0
        %v1103 = vadd.f32 %v520, %v1102
        %v1104 = vpop.f32.mrb[0].mxu0
        %v1105 = vadd.f32 %v516, %v1104
        %v1106 = vpop.f32.mrb[0].mxu0
        %v1107 = vadd.f32 %v520, %v1106
        %1108 = vmatprep.mubr.bf16.mxu0 %v992
        %1109 = vmatmul.mubr.bf16.gmra.mrb[0].mxu0 %v640
        %v1110 = vpop.f32.mrb[0].mxu0
        %v1111 = vadd.f32 %v516, %v1110
        %v1112 = vpop.f32.mrb[0].mxu0
        %v1113 = vadd.f32 %v520, %v1112
        %v1114 = vpop.f32.mrb[0].mxu0
        %v1115 = vadd.f32 %v516, %v1114
        %v1116 = vpop.f32.mrb[0].mxu0
        %v1117 = vadd.f32 %v520, %v1116
        %1118 = vmatprep.mubr.bf16.mxu0 %v995
        %1119 = vmatmul.mubr.bf16.gmra.mrb[0].mxu0 %v642
        %v1120 = vpop.f32.mrb[0].mxu0
        %v1121 = vadd.f32 %v516, %v1120
        %v1122 = vpop.f32.mrb[0].mxu0
        %v1123 = vadd.f32 %v520, %v1122
        %v1124 = vpop.f32.mrb[0].mxu0
        %v1125 = vadd.f32 %v516, %v1124
        %v1126 = vpop.f32.mrb[0].mxu0
        %v1127 = vadd.f32 %v520, %v1126
        %1128 = vmatprep.mubr.bf16.mxu0 %v998
        %1129 = vmatmul.mubr.bf16.gmra.mrb[0].mxu0 %v644
        %v1130 = vpop.f32.mrb[0].mxu0
        %v1131 = vadd.f32 %v516, %v1130
        %v1132 = vpop.f32.mrb[0].mxu0
        %v1133 = vadd.f32 %v520, %v1132
        %v1134 = vpop.f32.mrb[0].mxu0
        %v1135 = vadd.f32 %v516, %v1134
        %v1136 = vpop.f32.mrb[0].mxu0
        %v1137 = vadd.f32 %v520, %v1136
        %1138 = vmatprep.mubr.bf16.mxu0 %v1001
        %1139 = vmatmul.mubr.bf16.gmra.mrb[0].mxu0 %v646
        %v1140 = vpop.f32.mrb[0].mxu0
        %v1141 = vadd.f32 %v516, %v1140
        %v1142 = vpop.f32.mrb[0].mxu0
        %v1143 = vadd.f32 %v520, %v1142
        %v1144 = vpop.f32.mrb[0].mxu0
        %v1145 = vadd.f32 %v516, %v1144
        %v1146 = vpop.f32.mrb[0].mxu0
        %v1147 = vadd.f32 %v520, %v1146
        %1148 = vmatprep.mubr.bf16.mxu0 %v1004
        %1149 = vmatmul.mubr.bf16.gmra.mrb[0].mxu0 %v648
        %v1150 = vpop.f32.mrb[0].mxu0
        %v1151 = vadd.f32 %v516, %v1150
        %v1152 = vpop.f32.mrb[0].mxu0
        %v1153 = vadd.f32 %v520, %v1152
        %v1154 = vpop.f32.mrb[0].mxu0
        %v1155 = vadd.f32 %v516, %v1154
        %v1156 = vpop.f32.mrb[0].mxu0
        %v1157 = vadd.f32 %v520, %v1156
        %1158 = vmatprep.mubr.bf16.mxu0 %v1007
        %1159 = vmatmul.mubr.bf16.gmra.mrb[0].mxu0 %v650
        %v1160 = vpop.f32.mrb[0].mxu0
        %v1161 = vadd.f32 %v516, %v1160
        %v1162 = vpop.f32.mrb[0].mxu0
        %v1163 = vadd.f32 %v520, %v1162
        %v1164 = vpop.f32.mrb[0].mxu0
        %v1165 = vadd.f32 %v516, %v1164
        %v1166 = vpop.f32.mrb[0].mxu0
        %v1167 = vadd.f32 %v520, %v1166
        %1168 = vmatprep.mubr.bf16.mxu0 %v1010
        %1169 = vmatmul.mubr.bf16.gmra.mrb[0].mxu0 %v652
        %v1170 = vpop.f32.mrb[0].mxu0
        %v1171 = vadd.f32 %v516, %v1170
        %v1172 = vpop.f32.mrb[0].mxu0
        %v1173 = vadd.f32 %v520, %v1172
        %v1174 = vpop.f32.mrb[0].mxu0
        %v1175 = vadd.f32 %v516, %v1174
        %v1176 = vpop.f32.mrb[0].mxu0
        %v1177 = vadd.f32 %v520, %v1176
        %1178 = vmatprep.mubr.bf16.mxu0 %v1013
        %1179 = vmatmul.mubr.bf16.gmra.mrb[0].mxu0 %v654
        %v1180 = vpop.f32.mrb[0].mxu0
        %v1181 = vadd.f32 %v516, %v1180
        %v1182 = vpop.f32.mrb[0].mxu0
        %v1183 = vadd.f32 %v520, %v1182
        %v1184 = vpop.f32.mrb[0].mxu0
        %v1185 = vadd.f32 %v516, %v1184
        %v1186 = vpop.f32.mrb[0].mxu0
        %v1187 = vadd.f32 %v520, %v1186
        %1188 = vmatprep.mubr.bf16.mxu0 %v1016
        %1189 = vmatmul.mubr.bf16.gmra.mrb[0].mxu0 %v656
        %v1190 = vpop.f32.mrb[0].mxu0
        %v1191 = vadd.f32 %v516, %v1190
        %v1192 = vpop.f32.mrb[0].mxu0
        %v1193 = vadd.f32 %v520, %v1192
        %v1194 = vpop.f32.mrb[0].mxu0
        %v1195 = vadd.f32 %v516, %v1194
        %v1196 = vpop.f32.mrb[0].mxu0
        %v1197 = vadd.f32 %v520, %v1196
        %1198 = vmatprep.mubr.bf16.mxu0 %v1019
        %1199 = vmatmul.mubr.bf16.gmra.mrb[0].mxu0 %v658
        %v1200 = vpop.f32.mrb[0].mxu0
        %v1201 = vadd.f32 %v516, %v1200
        %v1202 = vpop.f32.mrb[0].mxu0
        %v1203 = vadd.f32 %v520, %v1202
        %v1204 = vpop.f32.mrb[0].mxu0
        %v1205 = vadd.f32 %v516, %v1204
        %v1206 = vpop.f32.mrb[0].mxu0
        %v1207 = vadd.f32 %v520, %v1206
        %1208 = vmatprep.mubr.bf16.mxu0 %v1022
        %1209 = vmatmul.mubr.bf16.gmra.mrb[0].mxu0 %v660
        %v1210 = vpop.f32.mrb[0].mxu0
        %v1211 = vadd.f32 %v516, %v1210
        %v1212 = vpop.f32.mrb[0].mxu0
        %v1213 = vadd.f32 %v520, %v1212
        %v1214 = vpop.f32.mrb[0].mxu0
        %v1215 = vadd.f32 %v516, %v1214
        %v1216 = vpop.f32.mrb[0].mxu0
        %v1217 = vadd.f32 %v520, %v1216
        %1218 = vmatprep.mubr.bf16.mxu0 %v1025
        %1219 = vmatmul.mubr.bf16.gmra.mrb[0].mxu0 %v662
        %v1220 = vpop.f32.mrb[0].mxu0
        %v1221 = vadd.f32 %v516, %v1220
        %v1222 = vpop.f32.mrb[0].mxu0
        %v1223 = vadd.f32 %v520, %v1222
        %v1224 = vpop.f32.mrb[0].mxu0
        %v1225 = vadd.f32 %v516, %v1224
        %v1226 = vpop.f32.mrb[0].mxu0
        %v1227 = vadd.f32 %v520, %v1226
        %1228 = vmatprep.mubr.bf16.mxu0 %v1028
        %1229 = vmatmul.mubr.bf16.gmra.mrb[0].mxu0 %v664
        %v1230 = vpop.f32.mrb[0].mxu0
        %v1231 = vadd.f32 %v516, %v1230
        %v1232 = vpop.f32.mrb[0].mxu0
        %v1233 = vadd.f32 %v520, %v1232
        %v1234 = vpop.f32.mrb[0].mxu0
        %v1235 = vadd.f32 %v516, %v1234
        %v1236 = vpop.f32.mrb[0].mxu0
        %v1237 = vadd.f32 %v520, %v1236
        %1238 = vdwg.mxu0
        %1239 = vmatprep.subr.bf16.mxu0 %v869
        %1240 = vmatpush1.bf16.msra.mxu0 %v868
        %1241 = vmatprep.subr.bf16.mxu0 %v874
        %1242 = vmatpush1.bf16.msra.mxu0 %v873
        %1243 = vmatprep.subr.bf16.mxu0 %v879
        %1244 = vmatpush1.bf16.msra.mxu0 %v878
        %1245 = vmatprep.subr.bf16.mxu0 %v884
        %1246 = vmatpush1.bf16.msra.mxu0 %v883
        %1247 = vmatprep.subr.bf16.mxu0 %v889
        %1248 = vmatpush1.bf16.msra.mxu0 %v888
        %1249 = vmatprep.subr.bf16.mxu0 %v894
        %1250 = vmatpush1.bf16.msra.mxu0 %v893
        %1251 = vmatprep.subr.bf16.mxu0 %v899
        %1252 = vmatpush1.bf16.msra.mxu0 %v898
        %1253 = vmatprep.subr.bf16.mxu0 %v904
        %1254 = vmatpush1.bf16.msra.mxu0 %v903
        %1255 = vmatprep.subr.bf16.mxu0 %v909
        %1256 = vmatpush1.bf16.msra.mxu0 %v908
        %1257 = vmatprep.subr.bf16.mxu0 %v914
        %1258 = vmatpush1.bf16.msra.mxu0 %v913
        %1259 = vmatprep.subr.bf16.mxu0 %v919
        %1260 = vmatpush1.bf16.msra.mxu0 %v918
        %1261 = vmatprep.subr.bf16.mxu0 %v1041
        %1262 = vmatpush1.bf16.msra.mxu0 %v1038
        %1263 = vmatprep.subr.bf16.mxu0 0
        %1264 = vmatpush1.bf16.msra.mxu0 0
        %1265 = vmatprep.subr.bf16.mxu0 0
        %1266 = vmatpush1.bf16.msra.mxu0 0
        %1267 = vmatprep.subr.bf16.mxu0 0
        %1268 = vmatpush1.bf16.msra.mxu0 0
        %1269 = vmatprep.subr.bf16.mxu0 0
        %1270 = vmatpush1.bf16.msra.mxu0 0
        %1271 = vmatprep.mubr.bf16.mxu0 %v983
        %1272 = vmatmul.mubr.bf16.gmra.mrb[0].mxu0 %v634
        %v1273 = vpop.f32.mrb[0].mxu0
        %v1274 = vadd.f32 %v524, %v1273
        %v1275 = vpop.f32.mrb[0].mxu0
        %v1276 = vadd.f32 %v528, %v1275
        %v1277 = vpop.f32.mrb[0].mxu0
        %v1278 = vadd.f32 %v524, %v1277
        %v1279 = vpop.f32.mrb[0].mxu0
        %v1280 = vadd.f32 %v528, %v1279
        %1281 = vmatprep.mubr.bf16.mxu0 %v986
        %1282 = vmatmul.mubr.bf16.gmra.mrb[0].mxu0 %v636
        %v1283 = vpop.f32.mrb[0].mxu0
        %v1284 = vadd.f32 %v524, %v1283
        %v1285 = vpop.f32.mrb[0].mxu0
        %v1286 = vadd.f32 %v528, %v1285
        %v1287 = vpop.f32.mrb[0].mxu0
        %v1288 = vadd.f32 %v524, %v1287
        %v1289 = vpop.f32.mrb[0].mxu0
        %v1290 = vadd.f32 %v528, %v1289
        %1291 = vmatprep.mubr.bf16.mxu0 %v989
        %1292 = vmatmul.mubr.bf16.gmra.mrb[0].mxu0 %v638
        %v1293 = vpop.f32.mrb[0].mxu0
        %v1294 = vadd.f32 %v524, %v1293
        %v1295 = vpop.f32.mrb[0].mxu0
        %v1296 = vadd.f32 %v528, %v1295
        %v1297 = vpop.f32.mrb[0].mxu0
        %v1298 = vadd.f32 %v524, %v1297
        %v1299 = vpop.f32.mrb[0].mxu0
        %v1300 = vadd.f32 %v528, %v1299
        %1301 = vmatprep.mubr.bf16.mxu0 %v992
        %1302 = vmatmul.mubr.bf16.gmra.mrb[0].mxu0 %v640
        %v1303 = vpop.f32.mrb[0].mxu0
        %v1304 = vadd.f32 %v524, %v1303
        %v1305 = vpop.f32.mrb[0].mxu0
        %v1306 = vadd.f32 %v528, %v1305
        %v1307 = vpop.f32.mrb[0].mxu0
        %v1308 = vadd.f32 %v524, %v1307
        %v1309 = vpop.f32.mrb[0].mxu0
        %v1310 = vadd.f32 %v528, %v1309
        %1311 = vmatprep.mubr.bf16.mxu0 %v995
        %1312 = vmatmul.mubr.bf16.gmra.mrb[0].mxu0 %v642
        %v1313 = vpop.f32.mrb[0].mxu0
        %v1314 = vadd.f32 %v524, %v1313
        %v1315 = vpop.f32.mrb[0].mxu0
        %v1316 = vadd.f32 %v528, %v1315
        %v1317 = vpop.f32.mrb[0].mxu0
        %v1318 = vadd.f32 %v524, %v1317
        %v1319 = vpop.f32.mrb[0].mxu0
        %v1320 = vadd.f32 %v528, %v1319
        %1321 = vmatprep.mubr.bf16.mxu0 %v998
        %1322 = vmatmul.mubr.bf16.gmra.mrb[0].mxu0 %v644
        %v1323 = vpop.f32.mrb[0].mxu0
        %v1324 = vadd.f32 %v524, %v1323
        %v1325 = vpop.f32.mrb[0].mxu0
        %v1326 = vadd.f32 %v528, %v1325
        %v1327 = vpop.f32.mrb[0].mxu0
        %v1328 = vadd.f32 %v524, %v1327
        %v1329 = vpop.f32.mrb[0].mxu0
        %v1330 = vadd.f32 %v528, %v1329
        %1331 = vmatprep.mubr.bf16.mxu0 %v1001
        %1332 = vmatmul.mubr.bf16.gmra.mrb[0].mxu0 %v646
        %v1333 = vpop.f32.mrb[0].mxu0
        %v1334 = vadd.f32 %v524, %v1333
        %v1335 = vpop.f32.mrb[0].mxu0
        %v1336 = vadd.f32 %v528, %v1335
        %v1337 = vpop.f32.mrb[0].mxu0
        %v1338 = vadd.f32 %v524, %v1337
        %v1339 = vpop.f32.mrb[0].mxu0
        %v1340 = vadd.f32 %v528, %v1339
        %1341 = vmatprep.mubr.bf16.mxu0 %v1004
        %1342 = vmatmul.mubr.bf16.gmra.mrb[0].mxu0 %v648
        %v1343 = vpop.f32.mrb[0].mxu0
        %v1344 = vadd.f32 %v524, %v1343
        %v1345 = vpop.f32.mrb[0].mxu0
        %v1346 = vadd.f32 %v528, %v1345
        %v1347 = vpop.f32.mrb[0].mxu0
        %v1348 = vadd.f32 %v524, %v1347
        %v1349 = vpop.f32.mrb[0].mxu0
        %v1350 = vadd.f32 %v528, %v1349
        %1351 = vmatprep.mubr.bf16.mxu0 %v1007
        %1352 = vmatmul.mubr.bf16.gmra.mrb[0].mxu0 %v650
        %v1353 = vpop.f32.mrb[0].mxu0
        %v1354 = vadd.f32 %v524, %v1353
        %v1355 = vpop.f32.mrb[0].mxu0
        %v1356 = vadd.f32 %v528, %v1355
        %v1357 = vpop.f32.mrb[0].mxu0
        %v1358 = vadd.f32 %v524, %v1357
        %v1359 = vpop.f32.mrb[0].mxu0
        %v1360 = vadd.f32 %v528, %v1359
        %1361 = vmatprep.mubr.bf16.mxu0 %v1010
        %1362 = vmatmul.mubr.bf16.gmra.mrb[0].mxu0 %v652
        %v1363 = vpop.f32.mrb[0].mxu0
        %v1364 = vadd.f32 %v524, %v1363
        %v1365 = vpop.f32.mrb[0].mxu0
        %v1366 = vadd.f32 %v528, %v1365
        %v1367 = vpop.f32.mrb[0].mxu0
        %v1368 = vadd.f32 %v524, %v1367
        %v1369 = vpop.f32.mrb[0].mxu0
        %v1370 = vadd.f32 %v528, %v1369
        %1371 = vmatprep.mubr.bf16.mxu0 %v1013
        %1372 = vmatmul.mubr.bf16.gmra.mrb[0].mxu0 %v654
        %v1373 = vpop.f32.mrb[0].mxu0
        %v1374 = vadd.f32 %v524, %v1373
        %v1375 = vpop.f32.mrb[0].mxu0
        %v1376 = vadd.f32 %v528, %v1375
        %v1377 = vpop.f32.mrb[0].mxu0
        %v1378 = vadd.f32 %v524, %v1377
        %v1379 = vpop.f32.mrb[0].mxu0
        %v1380 = vadd.f32 %v528, %v1379
        %1381 = vmatprep.mubr.bf16.mxu0 %v1016
        %1382 = vmatmul.mubr.bf16.gmra.mrb[0].mxu0 %v656
        %v1383 = vpop.f32.mrb[0].mxu0
        %v1384 = vadd.f32 %v524, %v1383
        %v1385 = vpop.f32.mrb[0].mxu0
        %v1386 = vadd.f32 %v528, %v1385
        %v1387 = vpop.f32.mrb[0].mxu0
        %v1388 = vadd.f32 %v524, %v1387
        %v1389 = vpop.f32.mrb[0].mxu0
        %v1390 = vadd.f32 %v528, %v1389
        %1391 = vmatprep.mubr.bf16.mxu0 %v1019
        %1392 = vmatmul.mubr.bf16.gmra.mrb[0].mxu0 %v658
        %v1393 = vpop.f32.mrb[0].mxu0
        %v1394 = vadd.f32 %v524, %v1393
        %v1395 = vpop.f32.mrb[0].mxu0
        %v1396 = vadd.f32 %v528, %v1395
        %v1397 = vpop.f32.mrb[0].mxu0
        %v1398 = vadd.f32 %v524, %v1397
        %v1399 = vpop.f32.mrb[0].mxu0
        %v1400 = vadd.f32 %v528, %v1399
        %1401 = vmatprep.mubr.bf16.mxu0 %v1022
        %1402 = vmatmul.mubr.bf16.gmra.mrb[0].mxu0 %v660
        %v1403 = vpop.f32.mrb[0].mxu0
        %v1404 = vadd.f32 %v524, %v1403
        %v1405 = vpop.f32.mrb[0].mxu0
        %v1406 = vadd.f32 %v528, %v1405
        %v1407 = vpop.f32.mrb[0].mxu0
        %v1408 = vadd.f32 %v524, %v1407
        %v1409 = vpop.f32.mrb[0].mxu0
        %v1410 = vadd.f32 %v528, %v1409
        %1411 = vmatprep.mubr.bf16.mxu0 %v1025
        %1412 = vmatmul.mubr.bf16.gmra.mrb[0].mxu0 %v662
        %v1413 = vpop.f32.mrb[0].mxu0
        %v1414 = vadd.f32 %v524, %v1413
        %v1415 = vpop.f32.mrb[0].mxu0
        %v1416 = vadd.f32 %v528, %v1415
        %v1417 = vpop.f32.mrb[0].mxu0
        %v1418 = vadd.f32 %v524, %v1417
        %v1419 = vpop.f32.mrb[0].mxu0
        %v1420 = vadd.f32 %v528, %v1419
        %1421 = vmatprep.mubr.bf16.mxu0 %v1028
        %1422 = vmatmul.mubr.bf16.gmra.mrb[0].mxu0 %v664
        %v1423 = vpop.f32.mrb[0].mxu0
        %v1424 = vadd.f32 %v524, %v1423
        %v1425 = vpop.f32.mrb[0].mxu0
        %v1426 = vadd.f32 %v528, %v1425
        %v1427 = vpop.f32.mrb[0].mxu0
        %v1428 = vadd.f32 %v524, %v1427
        %v1429 = vpop.f32.mrb[0].mxu0
        %v1430 = vadd.f32 %v528, %v1429
        %1431 = vdwg.mxu0
        %1432 = vmatprep.subr.bf16.mxu0 0
        %1433 = vmatpush1.bf16.msra.mxu0 %v870
        %1434 = vmatprep.subr.bf16.mxu0 0
        %1435 = vmatpush1.bf16.msra.mxu0 %v875
        %1436 = vmatprep.subr.bf16.mxu0 0
        %1437 = vmatpush1.bf16.msra.mxu0 %v880
        %1438 = vmatprep.subr.bf16.mxu0 0
        %1439 = vmatpush1.bf16.msra.mxu0 %v885
        %1440 = vmatprep.subr.bf16.mxu0 0
        %1441 = vmatpush1.bf16.msra.mxu0 %v890
        %1442 = vmatprep.subr.bf16.mxu0 0
        %1443 = vmatpush1.bf16.msra.mxu0 %v895
        %1444 = vmatprep.subr.bf16.mxu0 0
        %1445 = vmatpush1.bf16.msra.mxu0 %v900
        %1446 = vmatprep.subr.bf16.mxu0 0
        %1447 = vmatpush1.bf16.msra.mxu0 %v905
        %1448 = vmatprep.subr.bf16.mxu0 0
        %1449 = vmatpush1.bf16.msra.mxu0 %v910
        %1450 = vmatprep.subr.bf16.mxu0 0
        %1451 = vmatpush1.bf16.msra.mxu0 %v915
        %1452 = vmatprep.subr.bf16.mxu0 0
        %1453 = vmatpush1.bf16.msra.mxu0 %v920
        %1454 = vmatprep.subr.bf16.mxu0 0
        %1455 = vmatpush1.bf16.msra.mxu0 %v1044
        %1456 = vmatprep.subr.bf16.mxu0 0
        %1457 = vmatpush1.bf16.msra.mxu0 0
        %1458 = vmatprep.subr.bf16.mxu0 0
        %1459 = vmatpush1.bf16.msra.mxu0 0
        %1460 = vmatprep.subr.bf16.mxu0 0
        %1461 = vmatpush1.bf16.msra.mxu0 0
        %1462 = vmatprep.subr.bf16.mxu0 0
        %1463 = vmatpush1.bf16.msra.mxu0 0
        %1464 = vmatprep.mubr.bf16.mxu0 %v983
        %1465 = vmatmul.mubr.bf16.gmra.mrb[0].mxu0 %v634
        %v1466 = vpop.f32.mrb[0].mxu0
        %v1467 = vadd.f32 %v532, %v1466
        %v1468 = vpop.f32.mrb[0].mxu0
        %v1469 = vpop.f32.mrb[0].mxu0
        %v1470 = vadd.f32 %v532, %v1469
        %v1471 = vpop.f32.mrb[0].mxu0
        %1472 = vmatprep.mubr.bf16.mxu0 %v986
        %1473 = vmatmul.mubr.bf16.gmra.mrb[0].mxu0 %v636
        %v1474 = vpop.f32.mrb[0].mxu0
        %v1475 = vadd.f32 %v532, %v1474
        %v1476 = vpop.f32.mrb[0].mxu0
        %v1477 = vpop.f32.mrb[0].mxu0
        %v1478 = vadd.f32 %v532, %v1477
        %v1479 = vpop.f32.mrb[0].mxu0
        %1480 = vmatprep.mubr.bf16.mxu0 %v989
        %1481 = vmatmul.mubr.bf16.gmra.mrb[0].mxu0 %v638
        %v1482 = vpop.f32.mrb[0].mxu0
        %v1483 = vadd.f32 %v532, %v1482
        %v1484 = vpop.f32.mrb[0].mxu0
        %v1485 = vpop.f32.mrb[0].mxu0
        %v1486 = vadd.f32 %v532, %v1485
        %v1487 = vpop.f32.mrb[0].mxu0
        %1488 = vmatprep.mubr.bf16.mxu0 %v992
        %1489 = vmatmul.mubr.bf16.gmra.mrb[0].mxu0 %v640
        %v1490 = vpop.f32.mrb[0].mxu0
        %v1491 = vadd.f32 %v532, %v1490
        %v1492 = vpop.f32.mrb[0].mxu0
        %v1493 = vpop.f32.mrb[0].mxu0
        %v1494 = vadd.f32 %v532, %v1493
        %v1495 = vpop.f32.mrb[0].mxu0
        %1496 = vmatprep.mubr.bf16.mxu0 %v995
        %1497 = vmatmul.mubr.bf16.gmra.mrb[0].mxu0 %v642
        %v1498 = vpop.f32.mrb[0].mxu0
        %v1499 = vadd.f32 %v532, %v1498
        %v1500 = vpop.f32.mrb[0].mxu0
        %v1501 = vpop.f32.mrb[0].mxu0
        %v1502 = vadd.f32 %v532, %v1501
        %v1503 = vpop.f32.mrb[0].mxu0
        %1504 = vmatprep.mubr.bf16.mxu0 %v998
        %1505 = vmatmul.mubr.bf16.gmra.mrb[0].mxu0 %v644
        %v1506 = vpop.f32.mrb[0].mxu0
        %v1507 = vadd.f32 %v532, %v1506
        %v1508 = vpop.f32.mrb[0].mxu0
        %v1509 = vpop.f32.mrb[0].mxu0
        %v1510 = vadd.f32 %v532, %v1509
        %v1511 = vpop.f32.mrb[0].mxu0
        %1512 = vmatprep.mubr.bf16.mxu0 %v1001
        %1513 = vmatmul.mubr.bf16.gmra.mrb[0].mxu0 %v646
        %v1514 = vpop.f32.mrb[0].mxu0
        %v1515 = vadd.f32 %v532, %v1514
        %v1516 = vpop.f32.mrb[0].mxu0
        %v1517 = vpop.f32.mrb[0].mxu0
        %v1518 = vadd.f32 %v532, %v1517
        %v1519 = vpop.f32.mrb[0].mxu0
        %1520 = vmatprep.mubr.bf16.mxu0 %v1004
        %1521 = vmatmul.mubr.bf16.gmra.mrb[0].mxu0 %v648
        %v1522 = vpop.f32.mrb[0].mxu0
        %v1523 = vadd.f32 %v532, %v1522
        %v1524 = vpop.f32.mrb[0].mxu0
        %v1525 = vpop.f32.mrb[0].mxu0
        %v1526 = vadd.f32 %v532, %v1525
        %v1527 = vpop.f32.mrb[0].mxu0
        %1528 = vmatprep.mubr.bf16.mxu0 %v1007
        %1529 = vmatmul.mubr.bf16.gmra.mrb[0].mxu0 %v650
        %v1530 = vpop.f32.mrb[0].mxu0
        %v1531 = vadd.f32 %v532, %v1530
        %v1532 = vpop.f32.mrb[0].mxu0
        %v1533 = vpop.f32.mrb[0].mxu0
        %v1534 = vadd.f32 %v532, %v1533
        %v1535 = vpop.f32.mrb[0].mxu0
        %1536 = vmatprep.mubr.bf16.mxu0 %v1010
        %1537 = vmatmul.mubr.bf16.gmra.mrb[0].mxu0 %v652
        %v1538 = vpop.f32.mrb[0].mxu0
        %v1539 = vadd.f32 %v532, %v1538
        %v1540 = vpop.f32.mrb[0].mxu0
        %v1541 = vpop.f32.mrb[0].mxu0
        %v1542 = vadd.f32 %v532, %v1541
        %v1543 = vpop.f32.mrb[0].mxu0
        %1544 = vmatprep.mubr.bf16.mxu0 %v1013
        %1545 = vmatmul.mubr.bf16.gmra.mrb[0].mxu0 %v654
        %v1546 = vpop.f32.mrb[0].mxu0
        %v1547 = vadd.f32 %v532, %v1546
        %v1548 = vpop.f32.mrb[0].mxu0
        %v1549 = vpop.f32.mrb[0].mxu0
        %v1550 = vadd.f32 %v532, %v1549
        %v1551 = vpop.f32.mrb[0].mxu0
        %1552 = vmatprep.mubr.bf16.mxu0 %v1016
        %1553 = vmatmul.mubr.bf16.gmra.mrb[0].mxu0 %v656
        %v1554 = vpop.f32.mrb[0].mxu0
        %v1555 = vadd.f32 %v532, %v1554
        %v1556 = vpop.f32.mrb[0].mxu0
        %v1557 = vpop.f32.mrb[0].mxu0
        %v1558 = vadd.f32 %v532, %v1557
        %v1559 = vpop.f32.mrb[0].mxu0
        %1560 = vmatprep.mubr.bf16.mxu0 %v1019
        %1561 = vmatmul.mubr.bf16.gmra.mrb[0].mxu0 %v658
        %v1562 = vpop.f32.mrb[0].mxu0
        %v1563 = vadd.f32 %v532, %v1562
        %v1564 = vpop.f32.mrb[0].mxu0
        %v1565 = vpop.f32.mrb[0].mxu0
        %v1566 = vadd.f32 %v532, %v1565
        %v1567 = vpop.f32.mrb[0].mxu0
        %1568 = vmatprep.mubr.bf16.mxu0 %v1022
        %1569 = vmatmul.mubr.bf16.gmra.mrb[0].mxu0 %v660
        %v1570 = vpop.f32.mrb[0].mxu0
        %v1571 = vadd.f32 %v532, %v1570
        %v1572 = vpop.f32.mrb[0].mxu0
        %v1573 = vpop.f32.mrb[0].mxu0
        %v1574 = vadd.f32 %v532, %v1573
        %v1575 = vpop.f32.mrb[0].mxu0
        %1576 = vmatprep.mubr.bf16.mxu0 %v1025
        %1577 = vmatmul.mubr.bf16.gmra.mrb[0].mxu0 %v662
        %v1578 = vpop.f32.mrb[0].mxu0
        %v1579 = vadd.f32 %v532, %v1578
        %v1580 = vpop.f32.mrb[0].mxu0
        %v1581 = vpop.f32.mrb[0].mxu0
        %v1582 = vadd.f32 %v532, %v1581
        %v1583 = vpop.f32.mrb[0].mxu0
        %1584 = vmatprep.mubr.bf16.mxu0 %v1028
        %1585 = vmatmul.mubr.bf16.gmra.mrb[0].mxu0 %v664
        %v1586 = vpop.f32.mrb[0].mxu0
        %v1587 = vadd.f32 %v532, %v1586
        %v1588 = vpop.f32.mrb[0].mxu0
        %v1589 = vpop.f32.mrb[0].mxu0
        %v1590 = vadd.f32 %v532, %v1589
        %v1591 = vpop.f32.mrb[0].mxu0
        %1592 = vdwg.mxu0
        %1593 = vst [vmem:[%s407] sm:$0xff] %v1081
        %1594 = vst [vmem:[%s407 + $0x8] sm:$0xff] %v1083
        %1595 = vst [vmem:[%s407 + $0x10] sm:$0xff] %v1274
        %1596 = vst [vmem:[%s407 + $0x18] sm:$0xff] %v1276
        %1597 = vst [vmem:[%s407 + $0x20] sm:$0xff] %v1467
        %1598 = vst [vmem:[%s407 + $0x28] sm:$0xff] %v1085
        %1599 = vst [vmem:[%s407 + $0x30] sm:$0xff] %v1087
        %1600 = vst [vmem:[%s407 + $0x38] sm:$0xff] %v1278
        %1601 = vst [vmem:[%s407 + $0x40] sm:$0xff] %v1280
        %1602 = vst [vmem:[%s407 + $0x48] sm:$0xff] %v1470
        %1603 = vst [vmem:[%s407 + $0x50] sm:$0xff] %v1091
        %1604 = vst [vmem:[%s407 + $0x58] sm:$0xff] %v1093
        %1605 = vst [vmem:[%s407 + $0x60] sm:$0xff] %v1284
        %1606 = vst [vmem:[%s407 + $0x68] sm:$0xff] %v1286
        %1607 = vst [vmem:[%s407 + $0x70] sm:$0xff] %v1475
        %1608 = vst [vmem:[%s407 + $0x78] sm:$0xff] %v1095
        %1609 = vst [vmem:[%s407 + $0x80] sm:$0xff] %v1097
        %1610 = vst [vmem:[%s407 + $0x88] sm:$0xff] %v1288
        %1611 = vst [vmem:[%s407 + $0x90] sm:$0xff] %v1290
        %1612 = vst [vmem:[%s407 + $0x98] sm:$0xff] %v1478
        %1613 = vst [vmem:[%s407 + $0xa0] sm:$0xff] %v1101
        %1614 = vst [vmem:[%s407 + $0xa8] sm:$0xff] %v1103
        %1615 = vst [vmem:[%s407 + $0xb0] sm:$0xff] %v1294
        %1616 = vst [vmem:[%s407 + $0xb8] sm:$0xff] %v1296
        %1617 = vst [vmem:[%s407 + $0xc0] sm:$0xff] %v1483
        %1618 = vst [vmem:[%s407 + $0xc8] sm:$0xff] %v1105
        %1619 = vst [vmem:[%s407 + $0xd0] sm:$0xff] %v1107
        %1620 = vst [vmem:[%s407 + $0xd8] sm:$0xff] %v1298
        %1621 = vst [vmem:[%s407 + $0xe0] sm:$0xff] %v1300
        %1622 = vst [vmem:[%s407 + $0xe8] sm:$0xff] %v1486
        %1623 = vst [vmem:[%s407 + $0xf0] sm:$0xff] %v1111
        %1624 = vst [vmem:[%s407 + $0xf8] sm:$0xff] %v1113
        %1625 = vst [vmem:[%s407 + $0x100] sm:$0xff] %v1304
        %1626 = vst [vmem:[%s407 + $0x108] sm:$0xff] %v1306
        %1627 = vst [vmem:[%s407 + $0x110] sm:$0xff] %v1491
        %1628 = vst [vmem:[%s407 + $0x118] sm:$0xff] %v1115
        %1629 = vst [vmem:[%s407 + $0x120] sm:$0xff] %v1117
        %1630 = vst [vmem:[%s407 + $0x128] sm:$0xff] %v1308
        %1631 = vst [vmem:[%s407 + $0x130] sm:$0xff] %v1310
        %1632 = vst [vmem:[%s407 + $0x138] sm:$0xff] %v1494
        %1633 = vst [vmem:[%s407 + $0x140] sm:$0xff] %v1121
        %1634 = vst [vmem:[%s407 + $0x148] sm:$0xff] %v1123
        %1635 = vst [vmem:[%s407 + $0x150] sm:$0xff] %v1314
        %1636 = vst [vmem:[%s407 + $0x158] sm:$0xff] %v1316
        %1637 = vst [vmem:[%s407 + $0x160] sm:$0xff] %v1499
        %1638 = vst [vmem:[%s407 + $0x168] sm:$0xff] %v1125
        %1639 = vst [vmem:[%s407 + $0x170] sm:$0xff] %v1127
        %1640 = vst [vmem:[%s407 + $0x178] sm:$0xff] %v1318
        %1641 = vst [vmem:[%s407 + $0x180] sm:$0xff] %v1320
        %1642 = vst [vmem:[%s407 + $0x188] sm:$0xff] %v1502
        %1643 = vst [vmem:[%s407 + $0x190] sm:$0xff] %v1131
        %1644 = vst [vmem:[%s407 + $0x198] sm:$0xff] %v1133
        %1645 = vst [vmem:[%s407 + $0x1a0] sm:$0xff] %v1324
        %1646 = vst [vmem:[%s407 + $0x1a8] sm:$0xff] %v1326
        %1647 = vst [vmem:[%s407 + $0x1b0] sm:$0xff] %v1507
        %1648 = vst [vmem:[%s407 + $0x1b8] sm:$0xff] %v1135
        %1649 = vst [vmem:[%s407 + $0x1c0] sm:$0xff] %v1137
        %1650 = vst [vmem:[%s407 + $0x1c8] sm:$0xff] %v1328
        %1651 = vst [vmem:[%s407 + $0x1d0] sm:$0xff] %v1330
        %1652 = vst [vmem:[%s407 + $0x1d8] sm:$0xff] %v1510
        %1653 = vst [vmem:[%s407 + $0x1e0] sm:$0xff] %v1141
        %1654 = vst [vmem:[%s407 + $0x1e8] sm:$0xff] %v1143
        %1655 = vst [vmem:[%s407 + $0x1f0] sm:$0xff] %v1334
        %1656 = vst [vmem:[%s407 + $0x1f8] sm:$0xff] %v1336
        %1657 = vst [vmem:[%s407 + $0x200] sm:$0xff] %v1515
        %1658 = vst [vmem:[%s407 + $0x208] sm:$0xff] %v1145
        %1659 = vst [vmem:[%s407 + $0x210] sm:$0xff] %v1147
        %1660 = vst [vmem:[%s407 + $0x218] sm:$0xff] %v1338
        %1661 = vst [vmem:[%s407 + $0x220] sm:$0xff] %v1340
        %1662 = vst [vmem:[%s407 + $0x228] sm:$0xff] %v1518
        %1663 = vst [vmem:[%s407 + $0x230] sm:$0xff] %v1151
        %1664 = vst [vmem:[%s407 + $0x238] sm:$0xff] %v1153
        %1665 = vst [vmem:[%s407 + $0x240] sm:$0xff] %v1344
        %1666 = vst [vmem:[%s407 + $0x248] sm:$0xff] %v1346
        %1667 = vst [vmem:[%s407 + $0x250] sm:$0xff] %v1523
        %1668 = vst [vmem:[%s407 + $0x258] sm:$0xff] %v1155
        %1669 = vst [vmem:[%s407 + $0x260] sm:$0xff] %v1157
        %1670 = vst [vmem:[%s407 + $0x268] sm:$0xff] %v1348
        %1671 = vst [vmem:[%s407 + $0x270] sm:$0xff] %v1350
        %1672 = vst [vmem:[%s407 + $0x278] sm:$0xff] %v1526
        %1673 = vst [vmem:[%s407 + $0x280] sm:$0xff] %v1161
        %1674 = vst [vmem:[%s407 + $0x288] sm:$0xff] %v1163
        %1675 = vst [vmem:[%s407 + $0x290] sm:$0xff] %v1354
        %1676 = vst [vmem:[%s407 + $0x298] sm:$0xff] %v1356
        %1677 = vst [vmem:[%s407 + $0x2a0] sm:$0xff] %v1531
        %1678 = vst [vmem:[%s407 + $0x2a8] sm:$0xff] %v1165
        %1679 = vst [vmem:[%s407 + $0x2b0] sm:$0xff] %v1167
        %1680 = vst [vmem:[%s407 + $0x2b8] sm:$0xff] %v1358
        %1681 = vst [vmem:[%s407 + $0x2c0] sm:$0xff] %v1360
        %1682 = vst [vmem:[%s407 + $0x2c8] sm:$0xff] %v1534
        %1683 = vst [vmem:[%s407 + $0x2d0] sm:$0xff] %v1171
        %1684 = vst [vmem:[%s407 + $0x2d8] sm:$0xff] %v1173
        %1685 = vst [vmem:[%s407 + $0x2e0] sm:$0xff] %v1364
        %1686 = vst [vmem:[%s407 + $0x2e8] sm:$0xff] %v1366
        %1687 = vst [vmem:[%s407 + $0x2f0] sm:$0xff] %v1539
        %1688 = vst [vmem:[%s407 + $0x2f8] sm:$0xff] %v1175
        %1689 = vst [vmem:[%s407 + $0x300] sm:$0xff] %v1177
        %1690 = vst [vmem:[%s407 + $0x308] sm:$0xff] %v1368
        %1691 = vst [vmem:[%s407 + $0x310] sm:$0xff] %v1370
        %1692 = vst [vmem:[%s407 + $0x318] sm:$0xff] %v1542
        %1693 = vst [vmem:[%s407 + $0x320] sm:$0xff] %v1181
        %1694 = vst [vmem:[%s407 + $0x328] sm:$0xff] %v1183
        %1695 = vst [vmem:[%s407 + $0x330] sm:$0xff] %v1374
        %1696 = vst [vmem:[%s407 + $0x338] sm:$0xff] %v1376
        %1697 = vst [vmem:[%s407 + $0x340] sm:$0xff] %v1547
        %1698 = vst [vmem:[%s407 + $0x348] sm:$0xff] %v1185
        %1699 = vst [vmem:[%s407 + $0x350] sm:$0xff] %v1187
        %1700 = vst [vmem:[%s407 + $0x358] sm:$0xff] %v1378
        %1701 = vst [vmem:[%s407 + $0x360] sm:$0xff] %v1380
        %1702 = vst [vmem:[%s407 + $0x368] sm:$0xff] %v1550
        %1703 = vst [vmem:[%s407 + $0x370] sm:$0xff] %v1191
        %1704 = vst [vmem:[%s407 + $0x378] sm:$0xff] %v1193
        %1705 = vst [vmem:[%s407 + $0x380] sm:$0xff] %v1384
        %1706 = vst [vmem:[%s407 + $0x388] sm:$0xff] %v1386
        %1707 = vst [vmem:[%s407 + $0x390] sm:$0xff] %v1555
        %1708 = vst [vmem:[%s407 + $0x398] sm:$0xff] %v1195
        %1709 = vst [vmem:[%s407 + $0x3a0] sm:$0xff] %v1197
        %1710 = vst [vmem:[%s407 + $0x3a8] sm:$0xff] %v1388
        %1711 = vst [vmem:[%s407 + $0x3b0] sm:$0xff] %v1390
        %1712 = vst [vmem:[%s407 + $0x3b8] sm:$0xff] %v1558
        %1713 = vst [vmem:[%s407 + $0x3c0] sm:$0xff] %v1201
        %1714 = vst [vmem:[%s407 + $0x3c8] sm:$0xff] %v1203
        %1715 = vst [vmem:[%s407 + $0x3d0] sm:$0xff] %v1394
        %1716 = vst [vmem:[%s407 + $0x3d8] sm:$0xff] %v1396
        %1717 = vst [vmem:[%s407 + $0x3e0] sm:$0xff] %v1563
        %1718 = vst [vmem:[%s407 + $0x3e8] sm:$0xff] %v1205
        %1719 = vst [vmem:[%s407 + $0x3f0] sm:$0xff] %v1207
        %1720 = vst [vmem:[%s407 + $0x3f8] sm:$0xff] %v1398
        %1721 = vst [vmem:[%s407 + $0x400] sm:$0xff] %v1400
        %1722 = vst [vmem:[%s407 + $0x408] sm:$0xff] %v1566
        %1723 = vst [vmem:[%s407 + $0x410] sm:$0xff] %v1211
        %1724 = vst [vmem:[%s407 + $0x418] sm:$0xff] %v1213
        %1725 = vst [vmem:[%s407 + $0x420] sm:$0xff] %v1404
        %1726 = vst [vmem:[%s407 + $0x428] sm:$0xff] %v1406
        %1727 = vst [vmem:[%s407 + $0x430] sm:$0xff] %v1571
        %1728 = vst [vmem:[%s407 + $0x438] sm:$0xff] %v1215
        %1729 = vst [vmem:[%s407 + $0x440] sm:$0xff] %v1217
        %1730 = vst [vmem:[%s407 + $0x448] sm:$0xff] %v1408
        %1731 = vst [vmem:[%s407 + $0x450] sm:$0xff] %v1410
        %1732 = vst [vmem:[%s407 + $0x458] sm:$0xff] %v1574
        %1733 = vst [vmem:[%s407 + $0x460] sm:$0xff] %v1221
        %1734 = vst [vmem:[%s407 + $0x468] sm:$0xff] %v1223
        %1735 = vst [vmem:[%s407 + $0x470] sm:$0xff] %v1414
        %1736 = vst [vmem:[%s407 + $0x478] sm:$0xff] %v1416
        %1737 = vst [vmem:[%s407 + $0x480] sm:$0xff] %v1579
        %1738 = vst [vmem:[%s407 + $0x488] sm:$0xff] %v1225
        %1739 = vst [vmem:[%s407 + $0x490] sm:$0xff] %v1227
        %1740 = vst [vmem:[%s407 + $0x498] sm:$0xff] %v1418
        %1741 = vst [vmem:[%s407 + $0x4a0] sm:$0xff] %v1420
        %1742 = vst [vmem:[%s407 + $0x4a8] sm:$0xff] %v1582
        %1743 = vst [vmem:[%s407 + $0x4b0] sm:$0xff] %v1231
        %1744 = vst [vmem:[%s407 + $0x4b8] sm:$0xff] %v1233
        %1745 = vst [vmem:[%s407 + $0x4c0] sm:$0xff] %v1424
        %1746 = vst [vmem:[%s407 + $0x4c8] sm:$0xff] %v1426
        %1747 = vst [vmem:[%s407 + $0x4d0] sm:$0xff] %v1587
        %1748 = vst [vmem:[%s407 + $0x4d8] sm:$0xff] %v1235
        %1749 = vst [vmem:[%s407 + $0x4e0] sm:$0xff] %v1237
        %1750 = vst [vmem:[%s407 + $0x4e8] sm:$0xff] %v1428
        %1751 = vst [vmem:[%s407 + $0x4f0] sm:$0xff] %v1430
        %1752 = vst [vmem:[%s407 + $0x4f8] sm:$0xff] %v1590
        %v1753 = vld [vmem:[%s401] sm:$0xff]
        %v1754 = vld [vmem:[%s401 + $0x8] sm:$0xff]
        %v1755 = vld [vmem:[%s401 + $0x10] sm:$0xff]
        %v1756 = vld [vmem:[%s401 + $0x18] sm:$0xff]
        %v1757 = vld [vmem:[%s401 + $0x20] sm:$0xf]
        %v1758 = vld [vmem:[%s4] sm:$0xf]
        %v1759 = vld [vmem:[%s4 + $0x4] sm:$0xf]
        %v1760 = vld [vmem:[%s4 + $0x8] sm:$0xf]
        %v1761 = vld [vmem:[%s4 + $0xc] sm:$0xf]
        %v1762 = vld [vmem:[%s4 + $0x10] sm:$0xf]
        %v1763 = vld [vmem:[%s4 + $0x14] sm:$0xf]
        %v1764 = vld [vmem:[%s4 + $0x18] sm:$0xf]
        %v1765 = vld [vmem:[%s4 + $0x1c] sm:$0xf]
        %v1766 = vld [vmem:[%s4 + $0x20] sm:$0xf]
        %v1767 = vld [vmem:[%s4 + $0x24] sm:$0xf]
        %v1768 = vld [vmem:[%s4 + $0x28] sm:$0xf]
        %v1769 = vld [vmem:[%s4 + $0x2c] sm:$0xf]
        %v1770 = vld [vmem:[%s4 + $0x30] sm:$0xf]
        %v1771 = vld [vmem:[%s4 + $0x34] sm:$0xf]
        %v1772 = vld [vmem:[%s4 + $0x38] sm:$0xf]
        %v1773 = vld [vmem:[%s4 + $0x3c] sm:$0xf]
        %v1774 = vld [vmem:[%s4 + $0x40] sm:$0xf]
        %v1775 = vld [vmem:[%s4 + $0x44] sm:$0xf]
        %v1776 = vld [vmem:[%s4 + $0x48] sm:$0xf]
        %v1777 = vld [vmem:[%s4 + $0x4c] sm:$0xf]
        %v1778 = vld [vmem:[%s4 + $0x50] sm:$0xf]
        %v1779 = vld [vmem:[%s4 + $0x54] sm:$0xf]
        %v1780 = vld [vmem:[%s4 + $0x58] sm:$0xf]
        %v1781 = vld [vmem:[%s4 + $0x5c] sm:$0xf]
        %v1782 = vld [vmem:[%s4 + $0x60] sm:$0xf]
        %v1783 = vld [vmem:[%s4 + $0x64] sm:$0xf]
        %v1784 = vld [vmem:[%s4 + $0x68] sm:$0xf]
        %v1785 = vld [vmem:[%s4 + $0x6c] sm:$0xf]
        %v1786 = vld [vmem:[%s4 + $0x70] sm:$0xf]
        %v1787 = vld [vmem:[%s4 + $0x74] sm:$0xf]
        %v1788 = vld [vmem:[%s4 + $0x78] sm:$0xf]
        %v1789 = vld [vmem:[%s4 + $0x7c] sm:$0xf]
        %v1790 = vld [vmem:[%s4 + $0x80] sm:$0xf]
        %v1791 = vld [vmem:[%s4 + $0x84] sm:$0xf]
        %v1792 = vld [vmem:[%s4 + $0x88] sm:$0xf]
        %v1793 = vld [vmem:[%s4 + $0x8c] sm:$0xf]
        %v1794 = vld [vmem:[%s4 + $0x90] sm:$0xf]
        %v1795 = vld [vmem:[%s4 + $0x94] sm:$0xf]
        %v1796 = vld [vmem:[%s4 + $0x98] sm:$0xf]
        %v1797 = vld [vmem:[%s4 + $0x9c] sm:$0xf]
        %v1798 = vld [vmem:[%s4 + $0xa0] sm:$0xf]
        %v1799 = vld [vmem:[%s4 + $0xa4] sm:$0xf]
        %v1800 = vld [vmem:[%s4 + $0xa8] sm:$0xf]
        %v1801 = vld [vmem:[%s4 + $0xac] sm:$0xf]
        %v1802 = vld [vmem:[%s4 + $0xb0] sm:$0xf]
        %v1803 = vld [vmem:[%s4 + $0xb4] sm:$0xf]
        %v1804 = vld [vmem:[%s4 + $0xb8] sm:$0xf]
        %v1805 = vld [vmem:[%s4 + $0xbc] sm:$0xf]
        %v1806 = vld [vmem:[%s4 + $0xc0] sm:$0xf]
        %v1807 = vld [vmem:[%s4 + $0xc4] sm:$0xf]
        %v1808 = vld [vmem:[%s4 + $0xc8] sm:$0xf]
        %v1809 = vld [vmem:[%s4 + $0xcc] sm:$0xf]
        %v1810 = vld [vmem:[%s4 + $0xd0] sm:$0xf]
        %v1811 = vld [vmem:[%s4 + $0xd4] sm:$0xf]
        %v1812 = vld [vmem:[%s4 + $0xd8] sm:$0xf]
        %v1813 = vld [vmem:[%s4 + $0xdc] sm:$0xf]
        %v1814 = vld [vmem:[%s4 + $0xe0] sm:$0xf]
        %v1815 = vld [vmem:[%s4 + $0xe4] sm:$0xf]
        %v1816 = vld [vmem:[%s4 + $0xe8] sm:$0xf]
        %v1817 = vld [vmem:[%s4 + $0xec] sm:$0xf]
        %v1818 = vld [vmem:[%s4 + $0xf0] sm:$0xf]
        %v1819 = vld [vmem:[%s4 + $0xf4] sm:$0xf]
        %v1820 = vld [vmem:[%s4 + $0xf8] sm:$0xf]
        %v1821 = vld [vmem:[%s4 + $0xfc] sm:$0xf]
        %v1822 = vld [vmem:[%s4 + $0x100] sm:$0xf]
        %v1823 = vld [vmem:[%s4 + $0x104] sm:$0xf]
        %v1824 = vld [vmem:[%s4 + $0x108] sm:$0xf]
        %v1825 = vld [vmem:[%s4 + $0x10c] sm:$0xf]
        %v1826 = vld [vmem:[%s4 + $0x110] sm:$0xf]
        %v1827 = vld [vmem:[%s4 + $0x114] sm:$0xf]
        %v1828 = vld [vmem:[%s4 + $0x118] sm:$0xf]
        %v1829 = vld [vmem:[%s4 + $0x11c] sm:$0xf]
        %v1830 = vld [vmem:[%s4 + $0x120] sm:$0xf]
        %v1831 = vld [vmem:[%s4 + $0x124] sm:$0xf]
        %v1832 = vld [vmem:[%s4 + $0x128] sm:$0xf]
        %v1833 = vld [vmem:[%s4 + $0x12c] sm:$0xf]
        %v1834 = vld [vmem:[%s4 + $0x130] sm:$0xf]
        %v1835 = vld [vmem:[%s4 + $0x134] sm:$0xf]
        %v1836 = vld [vmem:[%s4 + $0x138] sm:$0xf]
        %v1837 = vld [vmem:[%s4 + $0x13c] sm:$0xf]
        %v1838 = vld [vmem:[%s4 + $0x140] sm:$0xf]
        %v1839 = vld [vmem:[%s4 + $0x144] sm:$0xf]
        %v1840 = vld [vmem:[%s4 + $0x148] sm:$0xf]
        %v1841 = vld [vmem:[%s4 + $0x14c] sm:$0xf]
        %v1842 = vld [vmem:[%s4 + $0x150] sm:$0xf]
        %v1843 = vld [vmem:[%s4 + $0x154] sm:$0xf]
        %v1844 = vld [vmem:[%s4 + $0x158] sm:$0xf]
        %v1845 = vld [vmem:[%s4 + $0x15c] sm:$0xf]
        %v1846 = vld [vmem:[%s4 + $0x160] sm:$0xf]
        %v1847 = vld [vmem:[%s4 + $0x164] sm:$0xf]
        %v1848 = vld [vmem:[%s4 + $0x168] sm:$0xf]
        %v1849 = vld [vmem:[%s4 + $0x16c] sm:$0xf]
        %v1850 = vld [vmem:[%s4 + $0x170] sm:$0xf]
        %v1851 = vld [vmem:[%s4 + $0x174] sm:$0xf]
        %v1852 = vld [vmem:[%s4 + $0x178] sm:$0xf]
        %v1853 = vld [vmem:[%s4 + $0x17c] sm:$0xf]
        %v1854 = vld [vmem:[%s4 + $0x180] sm:$0xf]
        %v1855 = vld [vmem:[%s4 + $0x184] sm:$0xf]
        %v1856 = vld [vmem:[%s4 + $0x188] sm:$0xf]
        %v1857 = vld [vmem:[%s4 + $0x18c] sm:$0xf]
        %v1858 = vld [vmem:[%s4 + $0x190] sm:$0xf]
        %v1859 = vld [vmem:[%s4 + $0x194] sm:$0xf]
        %v1860 = vld [vmem:[%s4 + $0x198] sm:$0xf]
        %v1861 = vld [vmem:[%s4 + $0x19c] sm:$0xf]
        %v1862 = vld [vmem:[%s4 + $0x1a0] sm:$0xf]
        %v1863 = vld [vmem:[%s4 + $0x1a4] sm:$0xf]
        %v1864 = vld [vmem:[%s4 + $0x1a8] sm:$0xf]
        %v1865 = vld [vmem:[%s4 + $0x1ac] sm:$0xf]
        %v1866 = vld [vmem:[%s4 + $0x1b0] sm:$0xf]
        %v1867 = vld [vmem:[%s4 + $0x1b4] sm:$0xf]
        %v1868 = vld [vmem:[%s4 + $0x1b8] sm:$0xf]
        %v1869 = vld [vmem:[%s4 + $0x1bc] sm:$0xf]
        %v1870 = vld [vmem:[%s4 + $0x1c0] sm:$0xf]
        %v1871 = vld [vmem:[%s4 + $0x1c4] sm:$0xf]
        %v1872 = vld [vmem:[%s4 + $0x1c8] sm:$0xf]
        %v1873 = vld [vmem:[%s4 + $0x1cc] sm:$0xf]
        %v1874 = vld [vmem:[%s4 + $0x1d0] sm:$0xf]
        %v1875 = vld [vmem:[%s4 + $0x1d4] sm:$0xf]
        %v1876 = vld [vmem:[%s4 + $0x1d8] sm:$0xf]
        %v1877 = vld [vmem:[%s4 + $0x1dc] sm:$0xf]
        %v1878 = vld [vmem:[%s4 + $0x1e0] sm:$0xf]
        %v1879 = vld [vmem:[%s4 + $0x1e4] sm:$0xf]
        %v1880 = vld [vmem:[%s4 + $0x1e8] sm:$0xf]
        %v1881 = vld [vmem:[%s4 + $0x1ec] sm:$0xf]
        %v1882 = vld [vmem:[%s4 + $0x1f0] sm:$0xf]
        %v1883 = vld [vmem:[%s4 + $0x1f4] sm:$0xf]
        %v1884 = vld [vmem:[%s4 + $0x1f8] sm:$0xf]
        %v1885 = vld [vmem:[%s4 + $0x1fc] sm:$0xf]
        %v1886 = vld [vmem:[%s4 + $0x200] sm:$0xf]
        %v1887 = vld [vmem:[%s4 + $0x204] sm:$0xf]
        %v1888 = vld [vmem:[%s4 + $0x208] sm:$0xf]
        %v1889 = vld [vmem:[%s4 + $0x20c] sm:$0xf]
        %v1890 = vld [vmem:[%s4 + $0x210] sm:$0xf]
        %v1891 = vld [vmem:[%s4 + $0x214] sm:$0xf]
        %v1892 = vld [vmem:[%s4 + $0x218] sm:$0xf]
        %v1893 = vld [vmem:[%s4 + $0x21c] sm:$0xf]
        %v1894 = vld [vmem:[%s4 + $0x220] sm:$0xf]
        %v1895 = vld [vmem:[%s4 + $0x224] sm:$0xf]
        %v1896 = vld [vmem:[%s4 + $0x228] sm:$0xf]
        %v1897 = vld [vmem:[%s4 + $0x22c] sm:$0xf]
        %v1898 = vld [vmem:[%s4 + $0x230] sm:$0xf]
        %v1899 = vld [vmem:[%s4 + $0x234] sm:$0xf]
        %v1900 = vld [vmem:[%s4 + $0x238] sm:$0xf]
        %v1901 = vld [vmem:[%s4 + $0x23c] sm:$0xf]
        %v1902 = vld [vmem:[%s5] sm:$0x1]
        %v1904 = vlaneseq
        %v1905 = vshrl.u32 %v1904, 7
        %v1906 = vsub.s32 0, %v1905
        %v1907 = vrot.slane %v1902, %v1906
        %v1914 = vunpack.c.l.b16 %v1753
        %v1915 = vunpack.c.h.b16 %v1753
        %v1916 = vunpack.c.l.b16 %v1754
        %v1917 = vunpack.c.h.b16 %v1754
        %v1918 = vunpack.c.l.b16 %v1755
        %v1919 = vunpack.c.h.b16 %v1755
        %v1920 = vunpack.c.l.b16 %v1756
        %v1921 = vunpack.c.h.b16 %v1756
        %v1922 = vunpack.c.l.b16 %v1757
        %v1923 = vpack.c.b16 %v1914, %v1914
        %v1924 = vpack.c.b16 %v1915, %v1915
        %v1925 = vpack.c.b16 %v1916, %v1916
        %v1926 = vpack.c.b16 %v1917, %v1917
        %v1927 = vpack.c.b16 %v1918, %v1918
        %v1928 = vpack.c.b16 %v1919, %v1919
        %v1929 = vpack.c.b16 %v1920, %v1920
        %v1930 = vpack.c.b16 %v1921, %v1921
        %v1931 = vpack.c.b16 %v1922, %v1922
        %v2085 = vunpack.c.l.b16 %v1758
        %v2086 = vunpack.c.l.b16 %v1759
        %v2087 = vunpack.c.l.b16 %v1760
        %v2088 = vunpack.c.l.b16 %v1761
        %v2089 = vunpack.c.l.b16 %v1762
        %v2090 = vunpack.c.l.b16 %v1763
        %v2091 = vunpack.c.l.b16 %v1764
        %v2092 = vunpack.c.l.b16 %v1765
        %v2093 = vunpack.c.l.b16 %v1766
        %v2094 = vunpack.c.l.b16 %v1767
        %v2095 = vunpack.c.l.b16 %v1768
        %v2096 = vunpack.c.l.b16 %v1769
        %v2097 = vunpack.c.l.b16 %v1770
        %v2098 = vunpack.c.l.b16 %v1771
        %v2099 = vunpack.c.l.b16 %v1772
        %v2100 = vunpack.c.l.b16 %v1773
        %v2101 = vunpack.c.l.b16 %v1774
        %v2102 = vunpack.c.l.b16 %v1775
        %v2103 = vunpack.c.l.b16 %v1776
        %v2104 = vunpack.c.l.b16 %v1777
        %v2105 = vunpack.c.l.b16 %v1778
        %v2106 = vunpack.c.l.b16 %v1779
        %v2107 = vunpack.c.l.b16 %v1780
        %v2108 = vunpack.c.l.b16 %v1781
        %v2109 = vunpack.c.l.b16 %v1782
        %v2110 = vunpack.c.l.b16 %v1783
        %v2111 = vunpack.c.l.b16 %v1784
        %v2112 = vunpack.c.l.b16 %v1785
        %v2113 = vunpack.c.l.b16 %v1786
        %v2114 = vunpack.c.l.b16 %v1787
        %v2115 = vunpack.c.l.b16 %v1788
        %v2116 = vunpack.c.l.b16 %v1789
        %v2117 = vunpack.c.l.b16 %v1790
        %v2118 = vunpack.c.l.b16 %v1791
        %v2119 = vunpack.c.l.b16 %v1792
        %v2120 = vunpack.c.l.b16 %v1793
        %v2121 = vunpack.c.l.b16 %v1794
        %v2122 = vunpack.c.l.b16 %v1795
        %v2123 = vunpack.c.l.b16 %v1796
        %v2124 = vunpack.c.l.b16 %v1797
        %v2125 = vunpack.c.l.b16 %v1798
        %v2126 = vunpack.c.l.b16 %v1799
        %v2127 = vunpack.c.l.b16 %v1800
        %v2128 = vunpack.c.l.b16 %v1801
        %v2129 = vunpack.c.l.b16 %v1802
        %v2130 = vunpack.c.l.b16 %v1803
        %v2131 = vunpack.c.l.b16 %v1804
        %v2132 = vunpack.c.l.b16 %v1805
        %v2133 = vunpack.c.l.b16 %v1806
        %v2134 = vunpack.c.l.b16 %v1807
        %v2135 = vunpack.c.l.b16 %v1808
        %v2136 = vunpack.c.l.b16 %v1809
        %v2137 = vunpack.c.l.b16 %v1810
        %v2138 = vunpack.c.l.b16 %v1811
        %v2139 = vunpack.c.l.b16 %v1812
        %v2140 = vunpack.c.l.b16 %v1813
        %v2141 = vunpack.c.l.b16 %v1814
        %v2142 = vunpack.c.l.b16 %v1815
        %v2143 = vunpack.c.l.b16 %v1816
        %v2144 = vunpack.c.l.b16 %v1817
        %v2145 = vunpack.c.l.b16 %v1818
        %v2146 = vunpack.c.l.b16 %v1819
        %v2147 = vunpack.c.l.b16 %v1820
        %v2148 = vunpack.c.l.b16 %v1821
        %v2149 = vunpack.c.l.b16 %v1822
        %v2150 = vunpack.c.l.b16 %v1823
        %v2151 = vunpack.c.l.b16 %v1824
        %v2152 = vunpack.c.l.b16 %v1825
        %v2153 = vunpack.c.l.b16 %v1826
        %v2154 = vunpack.c.l.b16 %v1827
        %v2155 = vunpack.c.l.b16 %v1828
        %v2156 = vunpack.c.l.b16 %v1829
        %v2157 = vunpack.c.l.b16 %v1830
        %v2158 = vunpack.c.l.b16 %v1831
        %v2159 = vunpack.c.l.b16 %v1832
        %v2160 = vunpack.c.l.b16 %v1833
        %v2161 = vunpack.c.l.b16 %v1834
        %v2162 = vunpack.c.l.b16 %v1835
        %v2163 = vunpack.c.l.b16 %v1836
        %v2164 = vunpack.c.l.b16 %v1837
        %v2165 = vunpack.c.l.b16 %v1838
        %v2166 = vunpack.c.l.b16 %v1839
        %v2167 = vunpack.c.l.b16 %v1840
        %v2168 = vunpack.c.l.b16 %v1841
        %v2169 = vunpack.c.l.b16 %v1842
        %v2170 = vunpack.c.l.b16 %v1843
        %v2171 = vunpack.c.l.b16 %v1844
        %v2172 = vunpack.c.l.b16 %v1845
        %v2173 = vunpack.c.l.b16 %v1846
        %v2174 = vunpack.c.l.b16 %v1847
        %v2175 = vunpack.c.l.b16 %v1848
        %v2176 = vunpack.c.l.b16 %v1849
        %v2177 = vunpack.c.l.b16 %v1850
        %v2178 = vunpack.c.l.b16 %v1851
        %v2179 = vunpack.c.l.b16 %v1852
        %v2180 = vunpack.c.l.b16 %v1853
        %v2181 = vunpack.c.l.b16 %v1854
        %v2182 = vunpack.c.l.b16 %v1855
        %v2183 = vunpack.c.l.b16 %v1856
        %v2184 = vunpack.c.l.b16 %v1857
        %v2185 = vunpack.c.l.b16 %v1858
        %v2186 = vunpack.c.l.b16 %v1859
        %v2187 = vunpack.c.l.b16 %v1860
        %v2188 = vunpack.c.l.b16 %v1861
        %v2189 = vunpack.c.l.b16 %v1862
        %v2190 = vunpack.c.l.b16 %v1863
        %v2191 = vunpack.c.l.b16 %v1864
        %v2192 = vunpack.c.l.b16 %v1865
        %v2193 = vunpack.c.l.b16 %v1866
        %v2194 = vunpack.c.l.b16 %v1867
        %v2195 = vunpack.c.l.b16 %v1868
        %v2196 = vunpack.c.l.b16 %v1869
        %v2197 = vunpack.c.l.b16 %v1870
        %v2198 = vunpack.c.l.b16 %v1871
        %v2199 = vunpack.c.l.b16 %v1872
        %v2200 = vunpack.c.l.b16 %v1873
        %v2201 = vunpack.c.l.b16 %v1874
        %v2202 = vunpack.c.l.b16 %v1875
        %v2203 = vunpack.c.l.b16 %v1876
        %v2204 = vunpack.c.l.b16 %v1877
        %v2205 = vunpack.c.l.b16 %v1878
        %v2206 = vunpack.c.l.b16 %v1879
        %v2207 = vunpack.c.l.b16 %v1880
        %v2208 = vunpack.c.l.b16 %v1881
        %v2209 = vunpack.c.l.b16 %v1882
        %v2210 = vunpack.c.l.b16 %v1883
        %v2211 = vunpack.c.l.b16 %v1884
        %v2212 = vunpack.c.l.b16 %v1885
        %v2213 = vunpack.c.l.b16 %v1886
        %v2214 = vunpack.c.l.b16 %v1887
        %v2215 = vunpack.c.l.b16 %v1888
        %v2216 = vunpack.c.l.b16 %v1889
        %v2217 = vunpack.c.l.b16 %v1890
        %v2218 = vunpack.c.l.b16 %v1891
        %v2219 = vunpack.c.l.b16 %v1892
        %v2220 = vunpack.c.l.b16 %v1893
        %v2221 = vunpack.c.l.b16 %v1894
        %v2222 = vunpack.c.l.b16 %v1895
        %v2223 = vunpack.c.l.b16 %v1896
        %v2224 = vunpack.c.l.b16 %v1897
        %v2225 = vunpack.c.l.b16 %v1898
        %v2226 = vunpack.c.l.b16 %v1899
        %v2227 = vunpack.c.l.b16 %v1900
        %v2228 = vunpack.c.l.b16 %v1901
        %v2229 = vpack.c.b16 %v2086, %v2085
        %v2230 = vpack.c.b16 %v2088, %v2087
        %v2231 = vpack.c.b16 %v2090, %v2089
        %v2232 = vpack.c.b16 %v2092, %v2091
        %v2233 = vpack.c.b16 %v2094, %v2093
        %v2234 = vpack.c.b16 %v2096, %v2095
        %v2235 = vpack.c.b16 %v2098, %v2097
        %v2236 = vpack.c.b16 %v2100, %v2099
        %v2237 = vpack.c.b16 %v2102, %v2101
        %v2238 = vpack.c.b16 %v2104, %v2103
        %v2239 = vpack.c.b16 %v2106, %v2105
        %v2240 = vpack.c.b16 %v2108, %v2107
        %v2241 = vpack.c.b16 %v2110, %v2109
        %v2242 = vpack.c.b16 %v2112, %v2111
        %v2243 = vpack.c.b16 %v2114, %v2113
        %v2244 = vpack.c.b16 %v2116, %v2115
        %v2245 = vpack.c.b16 %v2118, %v2117
        %v2246 = vpack.c.b16 %v2120, %v2119
        %v2247 = vpack.c.b16 %v2122, %v2121
        %v2248 = vpack.c.b16 %v2124, %v2123
        %v2249 = vpack.c.b16 %v2126, %v2125
        %v2250 = vpack.c.b16 %v2128, %v2127
        %v2251 = vpack.c.b16 %v2130, %v2129
        %v2252 = vpack.c.b16 %v2132, %v2131
        %v2253 = vpack.c.b16 %v2134, %v2133
        %v2254 = vpack.c.b16 %v2136, %v2135
        %v2255 = vpack.c.b16 %v2138, %v2137
        %v2256 = vpack.c.b16 %v2140, %v2139
        %v2257 = vpack.c.b16 %v2142, %v2141
        %v2258 = vpack.c.b16 %v2144, %v2143
        %v2259 = vpack.c.b16 %v2146, %v2145
        %v2260 = vpack.c.b16 %v2148, %v2147
        %v2261 = vpack.c.b16 %v2150, %v2149
        %v2262 = vpack.c.b16 %v2152, %v2151
        %v2263 = vpack.c.b16 %v2154, %v2153
        %v2264 = vpack.c.b16 %v2156, %v2155
        %v2265 = vpack.c.b16 %v2158, %v2157
        %v2266 = vpack.c.b16 %v2160, %v2159
        %v2267 = vpack.c.b16 %v2162, %v2161
        %v2268 = vpack.c.b16 %v2164, %v2163
        %v2269 = vpack.c.b16 %v2166, %v2165
        %v2270 = vpack.c.b16 %v2168, %v2167
        %v2271 = vpack.c.b16 %v2170, %v2169
        %v2272 = vpack.c.b16 %v2172, %v2171
        %v2273 = vpack.c.b16 %v2174, %v2173
        %v2274 = vpack.c.b16 %v2176, %v2175
        %v2275 = vpack.c.b16 %v2178, %v2177
        %v2276 = vpack.c.b16 %v2180, %v2179
        %v2277 = vpack.c.b16 %v2182, %v2181
        %v2278 = vpack.c.b16 %v2184, %v2183
        %v2279 = vpack.c.b16 %v2186, %v2185
        %v2280 = vpack.c.b16 %v2188, %v2187
        %v2281 = vpack.c.b16 %v2190, %v2189
        %v2282 = vpack.c.b16 %v2192, %v2191
        %v2283 = vpack.c.b16 %v2194, %v2193
        %v2284 = vpack.c.b16 %v2196, %v2195
        %v2285 = vpack.c.b16 %v2198, %v2197
        %v2286 = vpack.c.b16 %v2200, %v2199
        %v2287 = vpack.c.b16 %v2202, %v2201
        %v2288 = vpack.c.b16 %v2204, %v2203
        %v2289 = vpack.c.b16 %v2206, %v2205
        %v2290 = vpack.c.b16 %v2208, %v2207
        %v2291 = vpack.c.b16 %v2210, %v2209
        %v2292 = vpack.c.b16 %v2212, %v2211
        %v2293 = vpack.c.b16 %v2214, %v2213
        %v2294 = vpack.c.b16 %v2216, %v2215
        %v2295 = vpack.c.b16 %v2218, %v2217
        %v2296 = vpack.c.b16 %v2220, %v2219
        %v2297 = vpack.c.b16 %v2222, %v2221
        %v2298 = vpack.c.b16 %v2224, %v2223
        %v2299 = vpack.c.b16 %v2226, %v2225
        %v2300 = vpack.c.b16 %v2228, %v2227
        %2373 = vmatprep.subr.bf16.mxu0 0
        %2374 = vmatpush1.bf16.msra.mxu0 %v2229
        %2375 = vmatprep.subr.bf16.mxu0 0
        %2376 = vmatpush1.bf16.msra.mxu0 %v2230
        %2377 = vmatprep.subr.bf16.mxu0 0
        %2378 = vmatpush1.bf16.msra.mxu0 %v2231
        %2379 = vmatprep.subr.bf16.mxu0 0
        %2380 = vmatpush1.bf16.msra.mxu0 %v2232
        %2381 = vmatprep.subr.bf16.mxu0 0
        %2382 = vmatpush1.bf16.msra.mxu0 %v2233
        %2383 = vmatprep.subr.bf16.mxu0 0
        %2384 = vmatpush1.bf16.msra.mxu0 %v2234
        %2385 = vmatprep.subr.bf16.mxu0 0
        %2386 = vmatpush1.bf16.msra.mxu0 %v2235
        %2387 = vmatprep.subr.bf16.mxu0 0
        %2388 = vmatpush1.bf16.msra.mxu0 %v2236
        %2389 = vmatprep.subr.bf16.mxu0 0
        %2390 = vmatpush1.bf16.msra.mxu0 %v2237
        %2391 = vmatprep.subr.bf16.mxu0 0
        %2392 = vmatpush1.bf16.msra.mxu0 %v2238
        %2393 = vmatprep.subr.bf16.mxu0 0
        %2394 = vmatpush1.bf16.msra.mxu0 %v2239
        %2395 = vmatprep.subr.bf16.mxu0 0
        %2396 = vmatpush1.bf16.msra.mxu0 %v2240
        %2397 = vmatprep.subr.bf16.mxu0 0
        %2398 = vmatpush1.bf16.msra.mxu0 %v2241
        %2399 = vmatprep.subr.bf16.mxu0 0
        %2400 = vmatpush1.bf16.msra.mxu0 %v2242
        %2401 = vmatprep.subr.bf16.mxu0 0
        %2402 = vmatpush1.bf16.msra.mxu0 %v2243
        %2403 = vmatprep.subr.bf16.mxu0 0
        %2404 = vmatpush1.bf16.msra.mxu0 %v2244
        %2405 = vmatprep.mubr.bf16.mxu0 %v1924
        %2406 = vmatmul.mubr.bf16.gmra.mrb[0].mxu0 %v1923
        %v2407 = vpop.f32.mrb[0].mxu0
        %v2408 = vadd.f32 %v1907, %v2407
        %v2409 = vpop.f32.mrb[0].mxu0
        %v2410 = vpop.f32.mrb[0].mxu0
        %v2411 = vpop.f32.mrb[0].mxu0
        %2412 = vdwg.mxu0
        %2413 = vmatprep.subr.bf16.mxu0 0
        %2414 = vmatpush1.bf16.msra.mxu0 %v2245
        %2415 = vmatprep.subr.bf16.mxu0 0
        %2416 = vmatpush1.bf16.msra.mxu0 %v2246
        %2417 = vmatprep.subr.bf16.mxu0 0
        %2418 = vmatpush1.bf16.msra.mxu0 %v2247
        %2419 = vmatprep.subr.bf16.mxu0 0
        %2420 = vmatpush1.bf16.msra.mxu0 %v2248
        %2421 = vmatprep.subr.bf16.mxu0 0
        %2422 = vmatpush1.bf16.msra.mxu0 %v2249
        %2423 = vmatprep.subr.bf16.mxu0 0
        %2424 = vmatpush1.bf16.msra.mxu0 %v2250
        %2425 = vmatprep.subr.bf16.mxu0 0
        %2426 = vmatpush1.bf16.msra.mxu0 %v2251
        %2427 = vmatprep.subr.bf16.mxu0 0
        %2428 = vmatpush1.bf16.msra.mxu0 %v2252
        %2429 = vmatprep.subr.bf16.mxu0 0
        %2430 = vmatpush1.bf16.msra.mxu0 %v2253
        %2431 = vmatprep.subr.bf16.mxu0 0
        %2432 = vmatpush1.bf16.msra.mxu0 %v2254
        %2433 = vmatprep.subr.bf16.mxu0 0
        %2434 = vmatpush1.bf16.msra.mxu0 %v2255
        %2435 = vmatprep.subr.bf16.mxu0 0
        %2436 = vmatpush1.bf16.msra.mxu0 %v2256
        %2437 = vmatprep.subr.bf16.mxu0 0
        %2438 = vmatpush1.bf16.msra.mxu0 %v2257
        %2439 = vmatprep.subr.bf16.mxu0 0
        %2440 = vmatpush1.bf16.msra.mxu0 %v2258
        %2441 = vmatprep.subr.bf16.mxu0 0
        %2442 = vmatpush1.bf16.msra.mxu0 %v2259
        %2443 = vmatprep.subr.bf16.mxu0 0
        %2444 = vmatpush1.bf16.msra.mxu0 %v2260
        %2445 = vmatprep.mubr.bf16.mxu0 %v1926
        %2446 = vmatmul.mubr.bf16.gmra.mrb[0].mxu0 %v1925
        %v2447 = vpop.f32.mrb[0].mxu0
        %v2448 = vadd.f32 %v2408, %v2447
        %v2449 = vpop.f32.mrb[0].mxu0
        %v2450 = vpop.f32.mrb[0].mxu0
        %v2451 = vpop.f32.mrb[0].mxu0
        %2452 = vdwg.mxu0
        %2453 = vmatprep.subr.bf16.mxu0 0
        %2454 = vmatpush1.bf16.msra.mxu0 %v2261
        %2455 = vmatprep.subr.bf16.mxu0 0
        %2456 = vmatpush1.bf16.msra.mxu0 %v2262
        %2457 = vmatprep.subr.bf16.mxu0 0
        %2458 = vmatpush1.bf16.msra.mxu0 %v2263
        %2459 = vmatprep.subr.bf16.mxu0 0
        %2460 = vmatpush1.bf16.msra.mxu0 %v2264
        %2461 = vmatprep.subr.bf16.mxu0 0
        %2462 = vmatpush1.bf16.msra.mxu0 %v2265
        %2463 = vmatprep.subr.bf16.mxu0 0
        %2464 = vmatpush1.bf16.msra.mxu0 %v2266
        %2465 = vmatprep.subr.bf16.mxu0 0
        %2466 = vmatpush1.bf16.msra.mxu0 %v2267
        %2467 = vmatprep.subr.bf16.mxu0 0
        %2468 = vmatpush1.bf16.msra.mxu0 %v2268
        %2469 = vmatprep.subr.bf16.mxu0 0
        %2470 = vmatpush1.bf16.msra.mxu0 %v2269
        %2471 = vmatprep.subr.bf16.mxu0 0
        %2472 = vmatpush1.bf16.msra.mxu0 %v2270
        %2473 = vmatprep.subr.bf16.mxu0 0
        %2474 = vmatpush1.bf16.msra.mxu0 %v2271
        %2475 = vmatprep.subr.bf16.mxu0 0
        %2476 = vmatpush1.bf16.msra.mxu0 %v2272
        %2477 = vmatprep.subr.bf16.mxu0 0
        %2478 = vmatpush1.bf16.msra.mxu0 %v2273
        %2479 = vmatprep.subr.bf16.mxu0 0
        %2480 = vmatpush1.bf16.msra.mxu0 %v2274
        %2481 = vmatprep.subr.bf16.mxu0 0
        %2482 = vmatpush1.bf16.msra.mxu0 %v2275
        %2483 = vmatprep.subr.bf16.mxu0 0
        %2484 = vmatpush1.bf16.msra.mxu0 %v2276
        %2485 = vmatprep.mubr.bf16.mxu0 %v1928
        %2486 = vmatmul.mubr.bf16.gmra.mrb[0].mxu0 %v1927
        %v2487 = vpop.f32.mrb[0].mxu0
        %v2488 = vadd.f32 %v2448, %v2487
        %v2489 = vpop.f32.mrb[0].mxu0
        %v2490 = vpop.f32.mrb[0].mxu0
        %v2491 = vpop.f32.mrb[0].mxu0
        %2492 = vdwg.mxu0
        %2493 = vmatprep.subr.bf16.mxu0 0
        %2494 = vmatpush1.bf16.msra.mxu0 %v2277
        %2495 = vmatprep.subr.bf16.mxu0 0
        %2496 = vmatpush1.bf16.msra.mxu0 %v2278
        %2497 = vmatprep.subr.bf16.mxu0 0
        %2498 = vmatpush1.bf16.msra.mxu0 %v2279
        %2499 = vmatprep.subr.bf16.mxu0 0
        %2500 = vmatpush1.bf16.msra.mxu0 %v2280
        %2501 = vmatprep.subr.bf16.mxu0 0
        %2502 = vmatpush1.bf16.msra.mxu0 %v2281
        %2503 = vmatprep.subr.bf16.mxu0 0
        %2504 = vmatpush1.bf16.msra.mxu0 %v2282
        %2505 = vmatprep.subr.bf16.mxu0 0
        %2506 = vmatpush1.bf16.msra.mxu0 %v2283
        %2507 = vmatprep.subr.bf16.mxu0 0
        %2508 = vmatpush1.bf16.msra.mxu0 %v2284
        %2509 = vmatprep.subr.bf16.mxu0 0
        %2510 = vmatpush1.bf16.msra.mxu0 %v2285
        %2511 = vmatprep.subr.bf16.mxu0 0
        %2512 = vmatpush1.bf16.msra.mxu0 %v2286
        %2513 = vmatprep.subr.bf16.mxu0 0
        %2514 = vmatpush1.bf16.msra.mxu0 %v2287
        %2515 = vmatprep.subr.bf16.mxu0 0
        %2516 = vmatpush1.bf16.msra.mxu0 %v2288
        %2517 = vmatprep.subr.bf16.mxu0 0
        %2518 = vmatpush1.bf16.msra.mxu0 %v2289
        %2519 = vmatprep.subr.bf16.mxu0 0
        %2520 = vmatpush1.bf16.msra.mxu0 %v2290
        %2521 = vmatprep.subr.bf16.mxu0 0
        %2522 = vmatpush1.bf16.msra.mxu0 %v2291
        %2523 = vmatprep.subr.bf16.mxu0 0
        %2524 = vmatpush1.bf16.msra.mxu0 %v2292
        %2525 = vmatprep.mubr.bf16.mxu0 %v1930
        %2526 = vmatmul.mubr.bf16.gmra.mrb[0].mxu0 %v1929
        %v2527 = vpop.f32.mrb[0].mxu0
        %v2528 = vadd.f32 %v2488, %v2527
        %v2529 = vpop.f32.mrb[0].mxu0
        %v2530 = vpop.f32.mrb[0].mxu0
        %v2531 = vpop.f32.mrb[0].mxu0
        %2532 = vdwg.mxu0
        %2533 = vmatprep.subr.bf16.mxu0 0
        %2534 = vmatpush1.bf16.msra.mxu0 %v2293
        %2535 = vmatprep.subr.bf16.mxu0 0
        %2536 = vmatpush1.bf16.msra.mxu0 %v2294
        %2537 = vmatprep.subr.bf16.mxu0 0
        %2538 = vmatpush1.bf16.msra.mxu0 %v2295
        %2539 = vmatprep.subr.bf16.mxu0 0
        %2540 = vmatpush1.bf16.msra.mxu0 %v2296
        %2541 = vmatprep.subr.bf16.mxu0 0
        %2542 = vmatpush1.bf16.msra.mxu0 %v2297
        %2543 = vmatprep.subr.bf16.mxu0 0
        %2544 = vmatpush1.bf16.msra.mxu0 %v2298
        %2545 = vmatprep.subr.bf16.mxu0 0
        %2546 = vmatpush1.bf16.msra.mxu0 %v2299
        %2547 = vmatprep.subr.bf16.mxu0 0
        %2548 = vmatpush1.bf16.msra.mxu0 %v2300
        %2549 = vmatprep.subr.bf16.mxu0 0
        %2550 = vmatpush1.bf16.msra.mxu0 0
        %2551 = vmatprep.subr.bf16.mxu0 0
        %2552 = vmatpush1.bf16.msra.mxu0 0
        %2553 = vmatprep.subr.bf16.mxu0 0
        %2554 = vmatpush1.bf16.msra.mxu0 0
        %2555 = vmatprep.subr.bf16.mxu0 0
        %2556 = vmatpush1.bf16.msra.mxu0 0
        %2557 = vmatprep.subr.bf16.mxu0 0
        %2558 = vmatpush1.bf16.msra.mxu0 0
        %2559 = vmatprep.subr.bf16.mxu0 0
        %2560 = vmatpush1.bf16.msra.mxu0 0
        %2561 = vmatprep.subr.bf16.mxu0 0
        %2562 = vmatpush1.bf16.msra.mxu0 0
        %2563 = vmatprep.subr.bf16.mxu0 0
        %2564 = vmatpush1.bf16.msra.mxu0 0
        %2565 = vmatprep.mubr.bf16.mxu0 0
        %2566 = vmatmul.mubr.bf16.gmra.mrb[0].mxu0 %v1931
        %v2567 = vpop.f32.mrb[0].mxu0
        %v2568 = vadd.f32 %v2528, %v2567
        %v2569 = vpop.f32.mrb[0].mxu0
        %v2570 = vpop.f32.mrb[0].mxu0
        %v2571 = vpop.f32.mrb[0].mxu0
        %2572 = vdwg.mxu0
        %vm2573 = vcmask 982016
        %2574 = vst.msk [vmem:[%s382] sm:$0xff] %vm2573, %v2568
        %v2575 = vld [vmem:[%s6] sm:$0xff]
        %v2576 = vld [vmem:[%s6 + $0x8] sm:$0xff]
        %v2577 = vld [vmem:[%s6 + $0x10] sm:$0xff]
        %v2578 = vld [vmem:[%s6 + $0x18] sm:$0xff]
        %v2579 = vld [vmem:[%s6 + $0x20] sm:$0xff]
        %v2580 = vld [vmem:[%s6 + $0x28] sm:$0xff]
        %v2581 = vld [vmem:[%s6 + $0x30] sm:$0xff]
        %v2582 = vld [vmem:[%s6 + $0x38] sm:$0xff]
        %v2583 = vld [vmem:[%s6 + $0x40] sm:$0xff]
        %v2584 = vld [vmem:[%s6 + $0x48] sm:$0xff]
        %v2585 = vld [vmem:[%s6 + $0x50] sm:$0xff]
        %v2586 = vld [vmem:[%s6 + $0x58] sm:$0xff]
        %v2587 = vld [vmem:[%s6 + $0x60] sm:$0xff]
        %v2588 = vld [vmem:[%s6 + $0x68] sm:$0xff]
        %v2589 = vld [vmem:[%s6 + $0x70] sm:$0xff]
        %v2590 = vld [vmem:[%s7] sm:$0x1]
        %v2592 = vlaneseq
        %v2593 = vshrl.u32 %v2592, 7
        %v2594 = vsub.s32 0, %v2593
        %v2595 = vrot.slane %v2590, %v2594
        %v2598 = vsel %vm2573, %v2568, 0
        %2600 = vmatprep.subr.mxu0 0.0
        %2601 = vmatpush1.msra.mxu0 %v2575
        %2602 = vmatprep.subr.mxu0 0.0
        %2603 = vmatpush1.msra.mxu0 %v2576
        %2604 = vmatprep.subr.mxu0 0.0
        %2605 = vmatpush1.msra.mxu0 %v2577
        %2606 = vmatprep.subr.mxu0 0.0
        %2607 = vmatpush1.msra.mxu0 %v2578
        %2608 = vmatprep.subr.mxu0 0.0
        %2609 = vmatpush1.msra.mxu0 %v2579
        %2610 = vmatprep.subr.mxu0 0.0
        %2611 = vmatpush1.msra.mxu0 %v2580
        %2612 = vmatprep.subr.mxu0 0.0
        %2613 = vmatpush1.msra.mxu0 %v2581
        %2614 = vmatprep.subr.mxu0 0.0
        %2615 = vmatpush1.msra.mxu0 %v2582
        %2616 = vmatprep.subr.mxu0 0.0
        %2617 = vmatpush1.msra.mxu0 %v2583
        %2618 = vmatprep.subr.mxu0 0.0
        %2619 = vmatpush1.msra.mxu0 %v2584
        %2620 = vmatprep.subr.mxu0 0.0
        %2621 = vmatpush1.msra.mxu0 %v2585
        %2622 = vmatprep.subr.mxu0 0.0
        %2623 = vmatpush1.msra.mxu0 %v2586
        %2624 = vmatprep.subr.mxu0 0.0
        %2625 = vmatpush1.msra.mxu0 %v2587
        %2626 = vmatprep.subr.mxu0 0.0
        %2627 = vmatpush1.msra.mxu0 %v2588
        %2628 = vmatprep.subr.mxu0 0.0
        %2629 = vmatpush1.msra.mxu0 %v2589
        %2630 = vmatprep.subr.mxu0 0.0
        %2631 = vmatpush1.msra.mxu0 0.0
        %2632 = vmatprep.subr.mxu0 0.0
        %2633 = vmatpush1.msra.mxu0 0.0
        %2634 = vmatprep.subr.mxu0 0.0
        %2635 = vmatpush1.msra.mxu0 0.0
        %2636 = vmatprep.subr.mxu0 0.0
        %2637 = vmatpush1.msra.mxu0 0.0
        %2638 = vmatprep.subr.mxu0 0.0
        %2639 = vmatpush1.msra.mxu0 0.0
        %2640 = vmatprep.subr.mxu0 0.0
        %2641 = vmatpush1.msra.mxu0 0.0
        %2642 = vmatprep.subr.mxu0 0.0
        %2643 = vmatpush1.msra.mxu0 0.0
        %2644 = vmatprep.subr.mxu0 0.0
        %2645 = vmatpush1.msra.mxu0 0.0
        %2646 = vmatprep.subr.mxu0 0.0
        %2647 = vmatpush1.msra.mxu0 0.0
        %2648 = vmatprep.subr.mxu0 0.0
        %2649 = vmatpush1.msra.mxu0 0.0
        %2650 = vmatprep.subr.mxu0 0.0
        %2651 = vmatpush1.msra.mxu0 0.0
        %2652 = vmatprep.subr.mxu0 0.0
        %2653 = vmatpush1.msra.mxu0 0.0
        %2654 = vmatprep.subr.mxu0 0.0
        %2655 = vmatpush1.msra.mxu0 0.0
        %2656 = vmatprep.subr.mxu0 0.0
        %2657 = vmatpush1.msra.mxu0 0.0
        %2658 = vmatprep.subr.mxu0 0.0
        %2659 = vmatpush1.msra.mxu0 0.0
        %2660 = vmatprep.subr.mxu0 0.0
        %2661 = vmatpush1.msra.mxu0 0.0
        %2662 = vmatprep.subr.mxu0 0.0
        %2663 = vmatpush1.msra.mxu0 0.0
        %2664 = vmatprep.mubr.f32.mxu0 0.0
        %2665 = vmatmul.mubr.f32.gmra.mrb[0].mxu0 %v2598
        %v2666 = vpop.f32.mrb[0].mxu0
        %v2667 = vadd.f32 %v2595, %v2666
        %v2668 = vpop.f32.mrb[0].mxu0
        %2669 = vdwg.mxu0
        %vm2670 = vcmask 80896
        %2671 = vst.msk [vmem:[%s389] sm:$0xff] %vm2670, %v2667
        %s2672 = smul.u32 32, %s28
        %p2673 = scmp.lt.s32.totalorder %s2672, 63
        %s2674 = scalar_select %p2673, %s2672, 63
        %s2675 = smul.addr %s2674, 5
        %s2676 = smul.addr %s2675, 8
        %s2677 = scalar_lea.vmem %s8, %s2676
        %s2678 = sand.u32 %s240, 1
        %s2679 = scalar_lea.sflag [#allocation3], %s2678
        %s2680 = sand.u32 %s240, 1
        %s2681 = smul.addr %s2680, 8
        %s2682 = scalar_lea.vmem [#allocation2], %s2681
        %s2683 = sand.u32 %s266, 1
        %s2684 = scalar_lea.sflag [#allocation5], %s2683
        %s2685 = sand.u32 %s266, 1
        %s2686 = smul.addr %s2685, 8
        %s2687 = scalar_lea.vmem [#allocation4], %s2686
        // Predicated region
        $region53: #{model_forward.1} parent=51 // pred_check
          %p2688 = pneg %p224
        $region54: #{model_forward.1} parent=51 // pred_check_branch
          %2690 = sbr.rel (%p2688) target = $region56
        $region55: #{model_forward.1} parent=51 // pred_region
          %s2691 = smul.u32 32, %s28
        $region56: #{model_forward.1} parent=51 // pred_fallthru
          _
        // Predicated region
        $region57: #{model_forward.1} parent=51 // pred_check
          %p2692 = pneg %p250
        $region58: #{model_forward.1} parent=51 // pred_check_branch
          %2694 = sbr.rel (%p2692) target = $region60
        $region59: #{model_forward.1} parent=51 // pred_region
          %s2696 = ssub.s32 128, 128
          %2697 = vsyncadd %s2679, %s2696
          %s2698 = smul.addr %s28, 128
          %s2699 = scalar_lea.hbm %s9, %s2698
          %s2701 = sshll.u32 %s2682, 4
          %s2702 = int_to_ptr.vmem [resolvable:$true] %s2701
          %2704 = dma.vmem_to_hbm [thread:$0]  %s2702, 128, %s2699, %s2679
        $region60: #{model_forward.1} parent=51 // pred_fallthru
          _
        // Predicated region
        $region61: #{model_forward.1} parent=51 // pred_check
          %p2705 = pneg %p276
        $region62: #{model_forward.1} parent=51 // pred_check_branch
          %2707 = sbr.rel (%p2705) target = $region64
        $region63: #{model_forward.1} parent=51 // pred_region
          %s2709 = ssub.s32 128, 128
          %2710 = vsyncadd %s2684, %s2709
          %s2711 = smul.addr %s28, 128
          %s2712 = scalar_lea.hbm %s10, %s2711
          %s2714 = sshll.u32 %s2687, 4
          %s2715 = int_to_ptr.vmem [resolvable:$true] %s2714
          %2717 = dma.vmem_to_hbm [thread:$0]  %s2715, 128, %s2712, %s2684
        $region64: #{model_forward.1} parent=51 // pred_fallthru
          _
      $region52: #{model_forward.1} parent=5 // pred_fallthru
        _
      %p2718 = scmp.le.s32.totalorder 2, %s23
      // Predicated region
      $region65: #{model_forward.1} parent=5 // pred_check
        %p2719 = pneg %p2718
      $region66: #{model_forward.1} parent=5 // pred_check_branch
        %2721 = sbr.rel (%p2719) target = $region68
      $region67: #{model_forward.1} parent=5 // pred_region
        %s2722 = ssub.s32 %s23, 2
        // Predicated region
        $region69: #{model_forward.1} parent=67 // pred_check
          %p2723 = pneg %p230
        $region70: #{model_forward.1} parent=67 // pred_check_branch
          %2725 = sbr.rel (%p2723) target = $region72
        $region71: #{model_forward.1} parent=67 // pred_region
          %s2726 = smul.u32 32, %s29
          %p2727 = scmp.lt.s32.totalorder %s2726, 63
          %s2728 = scalar_select %p2727, %s2726, 63
          %s2729 = smul.addr %s2728, 5
          %s2730 = smul.addr %s2729, 8
          %s2731 = scalar_lea.vmem %s8, %s2730
        $region72: #{model_forward.1} parent=67 // pred_fallthru
          _
        // Predicated region
        $region73: #{model_forward.1} parent=67 // pred_check
          %p2732 = pneg %p256
        $region74: #{model_forward.1} parent=67 // pred_check_branch
          %2734 = sbr.rel (%p2732) target = $region76
        $region75: #{model_forward.1} parent=67 // pred_region
          %s2735 = sand.u32 %s241, 1
          %s2736 = scalar_lea.sflag [#allocation3], %s2735
          %s2737 = sand.u32 %s241, 1
          %s2738 = smul.addr %s2737, 8
          %s2739 = scalar_lea.vmem [#allocation2], %s2738
          %2740 = dma.done %s2736, 128
        $region76: #{model_forward.1} parent=67 // pred_fallthru
          _
        // Predicated region
        $region77: #{model_forward.1} parent=67 // pred_check
          %p2741 = pneg %p282
        $region78: #{model_forward.1} parent=67 // pred_check_branch
          %2743 = sbr.rel (%p2741) target = $region80
        $region79: #{model_forward.1} parent=67 // pred_region
          %s2744 = sand.u32 %s267, 1
          %s2745 = scalar_lea.sflag [#allocation5], %s2744
          %s2746 = sand.u32 %s267, 1
          %s2747 = smul.addr %s2746, 8
          %s2748 = scalar_lea.vmem [#allocation4], %s2747
          %2749 = dma.done %s2745, 128
        $region80: #{model_forward.1} parent=67 // pred_fallthru
          _
      $region68: #{model_forward.1} parent=5 // pred_fallthru
        _
    $region6: #{model_forward.1} parent=1 // loop_footer
      %s27 = sadd.s32 1, %s23
    $region7: #{model_forward.1} parent=1 // loop_footer_branch
      %22 = sbr.rel target = $region3
    $region8: #{model_forward.1} parent=1 // loop_exit
      _
    %2750 = vsyncpa [#allocation3], 1
    %s2751 = scalar_lea.sflag [#allocation3], 1
    %2752 = vsyncpa %s2751, 1
    %2753 = vsyncpa [#allocation5], 1
    %s2754 = scalar_lea.sflag [#allocation5], 1
    %2755 = vsyncpa %s2754, 1

</llo_original>
